<compile_context>
chip_gen: v5e
topology: v5e:2x2
jax: 0.10.0
libtpu: 0.0.40
codegen_flags: <defaults>
</compile_context>

<pallas_src>
import math

import jax
import jax.numpy as jnp
from jax.experimental import pallas as pl
from jax.experimental.pallas import tpu as pltpu

_LANE = 128
_SUBLANE = 8


def _fused_1x1_convs_kernel(x_ref, w1_ref, b1_ref, w2_ref, b2_ref,
                            w3_ref, b3_ref, o_ref):
    """x_ref: (C_in, ts, 128) VMEM tile (channel-major; pixels on sublane/lane).
    w*_ref: (C_out, C_in) f32 SMEM.  b*_ref: (C_out,) f32 SMEM.
    o_ref: (C_out_final, ts, 128) VMEM tile.
    Each 1x1 conv is an unrolled sum over input channels of
    scalar_weight * pixel_slab (VPU), fused with tanh (EUP).
    """

    def layer_tanh(rows, w_ref, b_ref):
        c_out, c_in = w_ref.shape
        out = []
        for o in range(c_out):
            acc = rows[0] * w_ref[o, 0] + b_ref[o]
            for c in range(1, c_in):
                acc = acc + rows[c] * w_ref[o, c]
            out.append(jnp.tanh(acc))
        return out

    c_in = x_ref.shape[0]
    rows = [x_ref[c] for c in range(c_in)]        # each (ts, 128) f32
    rows = layer_tanh(rows, w1_ref, b1_ref)       # 3  -> 10
    rows = layer_tanh(rows, w2_ref, b2_ref)       # 10 -> 5
    rows = layer_tanh(rows, w3_ref, b3_ref)       # 5  -> 2
    for o, r in enumerate(rows):
        o_ref[o] = r.astype(o_ref.dtype)


def _pick_row_tile(s_rows, *, max_rows=1024):
    """Largest multiple of 8 that divides s_rows, capped, preferring >= 2 grid
    steps along the pixel axis so v7x's two TensorCores both get work."""
    cap = min(s_rows, max_rows)
    if s_rows >= 2 * _SUBLANE:
        cap = min(cap, s_rows // 2)
    cap -= cap % _SUBLANE
    for t in range(cap, _SUBLANE - 1, -_SUBLANE):
        if s_rows % t == 0:
            return t
    return _SUBLANE


def model_tanh_forward(x_nchw, params):
    """conv1(1x1) -> tanh -> conv2(1x1) -> tanh -> conv3(1x1) -> tanh.

    x_nchw: (N, 3, H, W) float32
    params: w1 (10,3), b1 (10,), w2 (5,10), b2 (5,), w3 (2,5), b3 (2,)
            (weights stored (C_out, C_in), matching PyTorch Conv2d layout)
    returns: (N, 2, H, W) float32
    """
    N, c_in, H, W = x_nchw.shape
    hw = H * W
    w1, b1 = params["w1"], params["b1"]
    w2, b2 = params["w2"], params["b2"]
    w3, b3 = params["w3"], params["b3"]
    c_out = w3.shape[0]

    # Free-view reshape to channel-major blocks: (N, C, HW) -> (N, C, rows, 128).
    pad = (-hw) % (_SUBLANE * _LANE)
    x_flat = x_nchw.reshape(N, c_in, hw)
    if pad:
        x_flat = jnp.pad(x_flat, ((0, 0), (0, 0), (0, pad)))
    hwp = hw + pad
    s_rows = hwp // _LANE
    x_blk = x_flat.reshape(N, c_in, s_rows, _LANE)

    ts = _pick_row_tile(s_rows)
    grid = (N, s_rows // ts)

    smem = pl.BlockSpec(memory_space=pltpu.MemorySpace.SMEM)

    out_blk = pl.pallas_call(
        _fused_1x1_convs_kernel,
        out_shape=jax.ShapeDtypeStruct((N, c_out, s_rows, _LANE), jnp.float32),
        grid_spec=pltpu.PrefetchScalarGridSpec(
            num_scalar_prefetch=0,
            grid=grid,
            in_specs=[
                pl.BlockSpec((None, c_in, ts, _LANE),
                             lambda n, i: (n, 0, i, 0)),
                smem, smem,   # w1, b1
                smem, smem,   # w2, b2
                smem, smem,   # w3, b3
            ],
            out_specs=pl.BlockSpec((None, c_out, ts, _LANE),
                                   lambda n, i: (n, 0, i, 0)),
        ),
        compiler_params=pltpu.CompilerParams(
            dimension_semantics=("parallel", "parallel")),
    )(x_blk, w1, b1, w2, b2, w3, b3)

    out = out_blk.reshape(N, c_out, hwp)[:, :, :hw].reshape(N, c_out, H, W)
    return out


def init_params(key):
    """Deterministic init mimicking PyTorch Conv2d default (uniform +-1/sqrt(fan_in))."""
    def conv_init(k, c_in, c_out):
        kw, kb = jax.random.split(k)
        bound = 1.0 / math.sqrt(c_in)
        w = jax.random.uniform(kw, (c_out, c_in), jnp.float32, -bound, bound)
        b = jax.random.uniform(kb, (c_out,), jnp.float32, -bound, bound)
        return w, b

    k1, k2, k3 = jax.random.split(key, 3)
    w1, b1 = conv_init(k1, 3, 10)
    w2, b2 = conv_init(k2, 10, 5)
    w3, b3 = conv_init(k3, 5, 2)
    return dict(w1=w1, b1=b1, w2=w2, b2=b2, w3=w3, b3=b3)


def reference(x_nchw, params):
    """Pure-JAX reference of the same forward pass."""
    def conv1x1(x, w, b):
        return jnp.einsum("oc,nchw->nohw", w, x) + b[None, :, None, None]

    t = jnp.tanh(conv1x1(x_nchw, params["w1"], params["b1"]))
    t = jnp.tanh(conv1x1(t, params["w2"], params["b2"]))
    t = jnp.tanh(conv1x1(t, params["w3"], params["b3"]))
    return t


if __name__ == "__main__":
    key = jax.random.PRNGKey(0)
    kx, kp = jax.random.split(key)

    # Shape from the original module spec: x4 = torch.randn(1, 3, 64, 64).
    x = jax.random.normal(kx, (1, 3, 64, 64), jnp.float32)
    params = init_params(kp)

    out = jax.block_until_ready(model_tanh_forward(x, params))

    ref = reference(x, params)
    assert out.shape == (1, 2, 64, 64), out.shape
    assert jnp.allclose(out, ref, atol=1e-5, rtol=1e-5), "mismatch vs reference"

    print("KERNEL_OK")
</pallas_src>

<mosaic_0001>
module attributes {stable_mosaic.version = 11 : i64} {
  func.func @_fused_1x1_convs_kernel(%arg0: i32, %arg1: i32, %arg2: memref<1x3x16x128xf32, #tpu.memory_space<vmem>>, %arg3: memref<10x3xf32, #tpu.memory_space<smem>>, %arg4: memref<10xf32, #tpu.memory_space<smem>>, %arg5: memref<5x10xf32, #tpu.memory_space<smem>>, %arg6: memref<5xf32, #tpu.memory_space<smem>>, %arg7: memref<2x5xf32, #tpu.memory_space<smem>>, %arg8: memref<2xf32, #tpu.memory_space<smem>>, %arg9: memref<1x2x16x128xf32, #tpu.memory_space<vmem>>) attributes {dimension_semantics = [#tpu.dimension_semantics<parallel>, #tpu.dimension_semantics<parallel>], iteration_bounds = array<i64: 1, 2>, scalar_prefetch = 0 : i64, scratch_operands = 0 : i64, tpu.core_type = #tpu.core_type<tc>, window_params = [{transform_indices = @transform_0, window_bounds = array<i64: 1, 3, 16, 128>}, {transform_indices = @transform_1, window_bounds = array<i64: 10, 3>}, {transform_indices = @transform_2, window_bounds = array<i64: 10>}, {transform_indices = @transform_3, window_bounds = array<i64: 5, 10>}, {transform_indices = @transform_4, window_bounds = array<i64: 5>}, {transform_indices = @transform_5, window_bounds = array<i64: 2, 5>}, {transform_indices = @transform_6, window_bounds = array<i64: 2>}, {transform_indices = @transform_7, window_bounds = array<i64: 1, 2, 16, 128>}]} {
    %c0 = arith.constant 0 : index
    %c0_0 = arith.constant 0 : index
    %c0_1 = arith.constant 0 : index
    %c0_2 = arith.constant 0 : index
    %0 = vector.load %arg2[%c0, %c0_0, %c0_1, %c0_2] : memref<1x3x16x128xf32, #tpu.memory_space<vmem>>, vector<1x1x16x128xf32>
    %1 = vector.shape_cast %0 : vector<1x1x16x128xf32> to vector<16x128xf32>
    %c0_3 = arith.constant 0 : index
    %c1 = arith.constant 1 : index
    %c0_4 = arith.constant 0 : index
    %c0_5 = arith.constant 0 : index
    %2 = vector.load %arg2[%c0_3, %c1, %c0_4, %c0_5] : memref<1x3x16x128xf32, #tpu.memory_space<vmem>>, vector<1x1x16x128xf32>
    %3 = vector.shape_cast %2 : vector<1x1x16x128xf32> to vector<16x128xf32>
    %c0_6 = arith.constant 0 : index
    %c2 = arith.constant 2 : index
    %c0_7 = arith.constant 0 : index
    %c0_8 = arith.constant 0 : index
    %4 = vector.load %arg2[%c0_6, %c2, %c0_7, %c0_8] : memref<1x3x16x128xf32, #tpu.memory_space<vmem>>, vector<1x1x16x128xf32>
    %5 = vector.shape_cast %4 : vector<1x1x16x128xf32> to vector<16x128xf32>
    %c0_9 = arith.constant 0 : index
    %c0_10 = arith.constant 0 : index
    %6 = memref.load %arg3[%c0_9, %c0_10] : memref<10x3xf32, #tpu.memory_space<smem>>
    %7 = vector.broadcast %6 : f32 to vector<16x128xf32>
    %8 = arith.mulf %1, %7 : vector<16x128xf32>
    %c0_11 = arith.constant 0 : index
    %9 = memref.load %arg4[%c0_11] : memref<10xf32, #tpu.memory_space<smem>>
    %10 = vector.broadcast %9 : f32 to vector<16x128xf32>
    %11 = arith.addf %8, %10 : vector<16x128xf32>
    %c0_12 = arith.constant 0 : index
    %c1_13 = arith.constant 1 : index
    %12 = memref.load %arg3[%c0_12, %c1_13] : memref<10x3xf32, #tpu.memory_space<smem>>
    %13 = vector.broadcast %12 : f32 to vector<16x128xf32>
    %14 = arith.mulf %3, %13 : vector<16x128xf32>
    %15 = arith.addf %11, %14 : vector<16x128xf32>
    %c0_14 = arith.constant 0 : index
    %c2_15 = arith.constant 2 : index
    %16 = memref.load %arg3[%c0_14, %c2_15] : memref<10x3xf32, #tpu.memory_space<smem>>
    %17 = vector.broadcast %16 : f32 to vector<16x128xf32>
    %18 = arith.mulf %5, %17 : vector<16x128xf32>
    %19 = arith.addf %15, %18 : vector<16x128xf32>
    %20 = math.tanh %19 : vector<16x128xf32>
    %c1_16 = arith.constant 1 : index
    %c0_17 = arith.constant 0 : index
    %21 = memref.load %arg3[%c1_16, %c0_17] : memref<10x3xf32, #tpu.memory_space<smem>>
    %22 = vector.broadcast %21 : f32 to vector<16x128xf32>
    %23 = arith.mulf %1, %22 : vector<16x128xf32>
    %c1_18 = arith.constant 1 : index
    %24 = memref.load %arg4[%c1_18] : memref<10xf32, #tpu.memory_space<smem>>
    %25 = vector.broadcast %24 : f32 to vector<16x128xf32>
    %26 = arith.addf %23, %25 : vector<16x128xf32>
    %c1_19 = arith.constant 1 : index
    %c1_20 = arith.constant 1 : index
    %27 = memref.load %arg3[%c1_19, %c1_20] : memref<10x3xf32, #tpu.memory_space<smem>>
    %28 = vector.broadcast %27 : f32 to vector<16x128xf32>
    %29 = arith.mulf %3, %28 : vector<16x128xf32>
    %30 = arith.addf %26, %29 : vector<16x128xf32>
    %c1_21 = arith.constant 1 : index
    %c2_22 = arith.constant 2 : index
    %31 = memref.load %arg3[%c1_21, %c2_22] : memref<10x3xf32, #tpu.memory_space<smem>>
    %32 = vector.broadcast %31 : f32 to vector<16x128xf32>
    %33 = arith.mulf %5, %32 : vector<16x128xf32>
    %34 = arith.addf %30, %33 : vector<16x128xf32>
    %35 = math.tanh %34 : vector<16x128xf32>
    %c2_23 = arith.constant 2 : index
    %c0_24 = arith.constant 0 : index
    %36 = memref.load %arg3[%c2_23, %c0_24] : memref<10x3xf32, #tpu.memory_space<smem>>
    %37 = vector.broadcast %36 : f32 to vector<16x128xf32>
    %38 = arith.mulf %1, %37 : vector<16x128xf32>
    %c2_25 = arith.constant 2 : index
    %39 = memref.load %arg4[%c2_25] : memref<10xf32, #tpu.memory_space<smem>>
    %40 = vector.broadcast %39 : f32 to vector<16x128xf32>
    %41 = arith.addf %38, %40 : vector<16x128xf32>
    %c2_26 = arith.constant 2 : index
    %c1_27 = arith.constant 1 : index
    %42 = memref.load %arg3[%c2_26, %c1_27] : memref<10x3xf32, #tpu.memory_space<smem>>
    %43 = vector.broadcast %42 : f32 to vector<16x128xf32>
    %44 = arith.mulf %3, %43 : vector<16x128xf32>
    %45 = arith.addf %41, %44 : vector<16x128xf32>
    %c2_28 = arith.constant 2 : index
    %c2_29 = arith.constant 2 : index
    %46 = memref.load %arg3[%c2_28, %c2_29] : memref<10x3xf32, #tpu.memory_space<smem>>
    %47 = vector.broadcast %46 : f32 to vector<16x128xf32>
    %48 = arith.mulf %5, %47 : vector<16x128xf32>
    %49 = arith.addf %45, %48 : vector<16x128xf32>
    %50 = math.tanh %49 : vector<16x128xf32>
    %c3 = arith.constant 3 : index
    %c0_30 = arith.constant 0 : index
    %51 = memref.load %arg3[%c3, %c0_30] : memref<10x3xf32, #tpu.memory_space<smem>>
    %52 = vector.broadcast %51 : f32 to vector<16x128xf32>
    %53 = arith.mulf %1, %52 : vector<16x128xf32>
    %c3_31 = arith.constant 3 : index
    %54 = memref.load %arg4[%c3_31] : memref<10xf32, #tpu.memory_space<smem>>
    %55 = vector.broadcast %54 : f32 to vector<16x128xf32>
    %56 = arith.addf %53, %55 : vector<16x128xf32>
    %c3_32 = arith.constant 3 : index
    %c1_33 = arith.constant 1 : index
    %57 = memref.load %arg3[%c3_32, %c1_33] : memref<10x3xf32, #tpu.memory_space<smem>>
    %58 = vector.broadcast %57 : f32 to vector<16x128xf32>
    %59 = arith.mulf %3, %58 : vector<16x128xf32>
    %60 = arith.addf %56, %59 : vector<16x128xf32>
    %c3_34 = arith.constant 3 : index
    %c2_35 = arith.constant 2 : index
    %61 = memref.load %arg3[%c3_34, %c2_35] : memref<10x3xf32, #tpu.memory_space<smem>>
    %62 = vector.broadcast %61 : f32 to vector<16x128xf32>
    %63 = arith.mulf %5, %62 : vector<16x128xf32>
    %64 = arith.addf %60, %63 : vector<16x128xf32>
    %65 = math.tanh %64 : vector<16x128xf32>
    %c4 = arith.constant 4 : index
    %c0_36 = arith.constant 0 : index
    %66 = memref.load %arg3[%c4, %c0_36] : memref<10x3xf32, #tpu.memory_space<smem>>
    %67 = vector.broadcast %66 : f32 to vector<16x128xf32>
    %68 = arith.mulf %1, %67 : vector<16x128xf32>
    %c4_37 = arith.constant 4 : index
    %69 = memref.load %arg4[%c4_37] : memref<10xf32, #tpu.memory_space<smem>>
    %70 = vector.broadcast %69 : f32 to vector<16x128xf32>
    %71 = arith.addf %68, %70 : vector<16x128xf32>
    %c4_38 = arith.constant 4 : index
    %c1_39 = arith.constant 1 : index
    %72 = memref.load %arg3[%c4_38, %c1_39] : memref<10x3xf32, #tpu.memory_space<smem>>
    %73 = vector.broadcast %72 : f32 to vector<16x128xf32>
    %74 = arith.mulf %3, %73 : vector<16x128xf32>
    %75 = arith.addf %71, %74 : vector<16x128xf32>
    %c4_40 = arith.constant 4 : index
    %c2_41 = arith.constant 2 : index
    %76 = memref.load %arg3[%c4_40, %c2_41] : memref<10x3xf32, #tpu.memory_space<smem>>
    %77 = vector.broadcast %76 : f32 to vector<16x128xf32>
    %78 = arith.mulf %5, %77 : vector<16x128xf32>
    %79 = arith.addf %75, %78 : vector<16x128xf32>
    %80 = math.tanh %79 : vector<16x128xf32>
    %c5 = arith.constant 5 : index
    %c0_42 = arith.constant 0 : index
    %81 = memref.load %arg3[%c5, %c0_42] : memref<10x3xf32, #tpu.memory_space<smem>>
    %82 = vector.broadcast %81 : f32 to vector<16x128xf32>
    %83 = arith.mulf %1, %82 : vector<16x128xf32>
    %c5_43 = arith.constant 5 : index
    %84 = memref.load %arg4[%c5_43] : memref<10xf32, #tpu.memory_space<smem>>
    %85 = vector.broadcast %84 : f32 to vector<16x128xf32>
    %86 = arith.addf %83, %85 : vector<16x128xf32>
    %c5_44 = arith.constant 5 : index
    %c1_45 = arith.constant 1 : index
    %87 = memref.load %arg3[%c5_44, %c1_45] : memref<10x3xf32, #tpu.memory_space<smem>>
    %88 = vector.broadcast %87 : f32 to vector<16x128xf32>
    %89 = arith.mulf %3, %88 : vector<16x128xf32>
    %90 = arith.addf %86, %89 : vector<16x128xf32>
    %c5_46 = arith.constant 5 : index
    %c2_47 = arith.constant 2 : index
    %91 = memref.load %arg3[%c5_46, %c2_47] : memref<10x3xf32, #tpu.memory_space<smem>>
    %92 = vector.broadcast %91 : f32 to vector<16x128xf32>
    %93 = arith.mulf %5, %92 : vector<16x128xf32>
    %94 = arith.addf %90, %93 : vector<16x128xf32>
    %95 = math.tanh %94 : vector<16x128xf32>
    %c6 = arith.constant 6 : index
    %c0_48 = arith.constant 0 : index
    %96 = memref.load %arg3[%c6, %c0_48] : memref<10x3xf32, #tpu.memory_space<smem>>
    %97 = vector.broadcast %96 : f32 to vector<16x128xf32>
    %98 = arith.mulf %1, %97 : vector<16x128xf32>
    %c6_49 = arith.constant 6 : index
    %99 = memref.load %arg4[%c6_49] : memref<10xf32, #tpu.memory_space<smem>>
    %100 = vector.broadcast %99 : f32 to vector<16x128xf32>
    %101 = arith.addf %98, %100 : vector<16x128xf32>
    %c6_50 = arith.constant 6 : index
    %c1_51 = arith.constant 1 : index
    %102 = memref.load %arg3[%c6_50, %c1_51] : memref<10x3xf32, #tpu.memory_space<smem>>
    %103 = vector.broadcast %102 : f32 to vector<16x128xf32>
    %104 = arith.mulf %3, %103 : vector<16x128xf32>
    %105 = arith.addf %101, %104 : vector<16x128xf32>
    %c6_52 = arith.constant 6 : index
    %c2_53 = arith.constant 2 : index
    %106 = memref.load %arg3[%c6_52, %c2_53] : memref<10x3xf32, #tpu.memory_space<smem>>
    %107 = vector.broadcast %106 : f32 to vector<16x128xf32>
    %108 = arith.mulf %5, %107 : vector<16x128xf32>
    %109 = arith.addf %105, %108 : vector<16x128xf32>
    %110 = math.tanh %109 : vector<16x128xf32>
    %c7 = arith.constant 7 : index
    %c0_54 = arith.constant 0 : index
    %111 = memref.load %arg3[%c7, %c0_54] : memref<10x3xf32, #tpu.memory_space<smem>>
    %112 = vector.broadcast %111 : f32 to vector<16x128xf32>
    %113 = arith.mulf %1, %112 : vector<16x128xf32>
    %c7_55 = arith.constant 7 : index
    %114 = memref.load %arg4[%c7_55] : memref<10xf32, #tpu.memory_space<smem>>
    %115 = vector.broadcast %114 : f32 to vector<16x128xf32>
    %116 = arith.addf %113, %115 : vector<16x128xf32>
    %c7_56 = arith.constant 7 : index
    %c1_57 = arith.constant 1 : index
    %117 = memref.load %arg3[%c7_56, %c1_57] : memref<10x3xf32, #tpu.memory_space<smem>>
    %118 = vector.broadcast %117 : f32 to vector<16x128xf32>
    %119 = arith.mulf %3, %118 : vector<16x128xf32>
    %120 = arith.addf %116, %119 : vector<16x128xf32>
    %c7_58 = arith.constant 7 : index
    %c2_59 = arith.constant 2 : index
    %121 = memref.load %arg3[%c7_58, %c2_59] : memref<10x3xf32, #tpu.memory_space<smem>>
    %122 = vector.broadcast %121 : f32 to vector<16x128xf32>
    %123 = arith.mulf %5, %122 : vector<16x128xf32>
    %124 = arith.addf %120, %123 : vector<16x128xf32>
    %125 = math.tanh %124 : vector<16x128xf32>
    %c8 = arith.constant 8 : index
    %c0_60 = arith.constant 0 : index
    %126 = memref.load %arg3[%c8, %c0_60] : memref<10x3xf32, #tpu.memory_space<smem>>
    %127 = vector.broadcast %126 : f32 to vector<16x128xf32>
    %128 = arith.mulf %1, %127 : vector<16x128xf32>
    %c8_61 = arith.constant 8 : index
    %129 = memref.load %arg4[%c8_61] : memref<10xf32, #tpu.memory_space<smem>>
    %130 = vector.broadcast %129 : f32 to vector<16x128xf32>
    %131 = arith.addf %128, %130 : vector<16x128xf32>
    %c8_62 = arith.constant 8 : index
    %c1_63 = arith.constant 1 : index
    %132 = memref.load %arg3[%c8_62, %c1_63] : memref<10x3xf32, #tpu.memory_space<smem>>
    %133 = vector.broadcast %132 : f32 to vector<16x128xf32>
    %134 = arith.mulf %3, %133 : vector<16x128xf32>
    %135 = arith.addf %131, %134 : vector<16x128xf32>
    %c8_64 = arith.constant 8 : index
    %c2_65 = arith.constant 2 : index
    %136 = memref.load %arg3[%c8_64, %c2_65] : memref<10x3xf32, #tpu.memory_space<smem>>
    %137 = vector.broadcast %136 : f32 to vector<16x128xf32>
    %138 = arith.mulf %5, %137 : vector<16x128xf32>
    %139 = arith.addf %135, %138 : vector<16x128xf32>
    %140 = math.tanh %139 : vector<16x128xf32>
    %c9 = arith.constant 9 : index
    %c0_66 = arith.constant 0 : index
    %141 = memref.load %arg3[%c9, %c0_66] : memref<10x3xf32, #tpu.memory_space<smem>>
    %142 = vector.broadcast %141 : f32 to vector<16x128xf32>
    %143 = arith.mulf %1, %142 : vector<16x128xf32>
    %c9_67 = arith.constant 9 : index
    %144 = memref.load %arg4[%c9_67] : memref<10xf32, #tpu.memory_space<smem>>
    %145 = vector.broadcast %144 : f32 to vector<16x128xf32>
    %146 = arith.addf %143, %145 : vector<16x128xf32>
    %c9_68 = arith.constant 9 : index
    %c1_69 = arith.constant 1 : index
    %147 = memref.load %arg3[%c9_68, %c1_69] : memref<10x3xf32, #tpu.memory_space<smem>>
    %148 = vector.broadcast %147 : f32 to vector<16x128xf32>
    %149 = arith.mulf %3, %148 : vector<16x128xf32>
    %150 = arith.addf %146, %149 : vector<16x128xf32>
    %c9_70 = arith.constant 9 : index
    %c2_71 = arith.constant 2 : index
    %151 = memref.load %arg3[%c9_70, %c2_71] : memref<10x3xf32, #tpu.memory_space<smem>>
    %152 = vector.broadcast %151 : f32 to vector<16x128xf32>
    %153 = arith.mulf %5, %152 : vector<16x128xf32>
    %154 = arith.addf %150, %153 : vector<16x128xf32>
    %155 = math.tanh %154 : vector<16x128xf32>
    %c0_72 = arith.constant 0 : index
    %c0_73 = arith.constant 0 : index
    %156 = memref.load %arg5[%c0_72, %c0_73] : memref<5x10xf32, #tpu.memory_space<smem>>
    %157 = vector.broadcast %156 : f32 to vector<16x128xf32>
    %158 = arith.mulf %20, %157 : vector<16x128xf32>
    %c0_74 = arith.constant 0 : index
    %159 = memref.load %arg6[%c0_74] : memref<5xf32, #tpu.memory_space<smem>>
    %160 = vector.broadcast %159 : f32 to vector<16x128xf32>
    %161 = arith.addf %158, %160 : vector<16x128xf32>
    %c0_75 = arith.constant 0 : index
    %c1_76 = arith.constant 1 : index
    %162 = memref.load %arg5[%c0_75, %c1_76] : memref<5x10xf32, #tpu.memory_space<smem>>
    %163 = vector.broadcast %162 : f32 to vector<16x128xf32>
    %164 = arith.mulf %35, %163 : vector<16x128xf32>
    %165 = arith.addf %161, %164 : vector<16x128xf32>
    %c0_77 = arith.constant 0 : index
    %c2_78 = arith.constant 2 : index
    %166 = memref.load %arg5[%c0_77, %c2_78] : memref<5x10xf32, #tpu.memory_space<smem>>
    %167 = vector.broadcast %166 : f32 to vector<16x128xf32>
    %168 = arith.mulf %50, %167 : vector<16x128xf32>
    %169 = arith.addf %165, %168 : vector<16x128xf32>
    %c0_79 = arith.constant 0 : index
    %c3_80 = arith.constant 3 : index
    %170 = memref.load %arg5[%c0_79, %c3_80] : memref<5x10xf32, #tpu.memory_space<smem>>
    %171 = vector.broadcast %170 : f32 to vector<16x128xf32>
    %172 = arith.mulf %65, %171 : vector<16x128xf32>
    %173 = arith.addf %169, %172 : vector<16x128xf32>
    %c0_81 = arith.constant 0 : index
    %c4_82 = arith.constant 4 : index
    %174 = memref.load %arg5[%c0_81, %c4_82] : memref<5x10xf32, #tpu.memory_space<smem>>
    %175 = vector.broadcast %174 : f32 to vector<16x128xf32>
    %176 = arith.mulf %80, %175 : vector<16x128xf32>
    %177 = arith.addf %173, %176 : vector<16x128xf32>
    %c0_83 = arith.constant 0 : index
    %c5_84 = arith.constant 5 : index
    %178 = memref.load %arg5[%c0_83, %c5_84] : memref<5x10xf32, #tpu.memory_space<smem>>
    %179 = vector.broadcast %178 : f32 to vector<16x128xf32>
    %180 = arith.mulf %95, %179 : vector<16x128xf32>
    %181 = arith.addf %177, %180 : vector<16x128xf32>
    %c0_85 = arith.constant 0 : index
    %c6_86 = arith.constant 6 : index
    %182 = memref.load %arg5[%c0_85, %c6_86] : memref<5x10xf32, #tpu.memory_space<smem>>
    %183 = vector.broadcast %182 : f32 to vector<16x128xf32>
    %184 = arith.mulf %110, %183 : vector<16x128xf32>
    %185 = arith.addf %181, %184 : vector<16x128xf32>
    %c0_87 = arith.constant 0 : index
    %c7_88 = arith.constant 7 : index
    %186 = memref.load %arg5[%c0_87, %c7_88] : memref<5x10xf32, #tpu.memory_space<smem>>
    %187 = vector.broadcast %186 : f32 to vector<16x128xf32>
    %188 = arith.mulf %125, %187 : vector<16x128xf32>
    %189 = arith.addf %185, %188 : vector<16x128xf32>
    %c0_89 = arith.constant 0 : index
    %c8_90 = arith.constant 8 : index
    %190 = memref.load %arg5[%c0_89, %c8_90] : memref<5x10xf32, #tpu.memory_space<smem>>
    %191 = vector.broadcast %190 : f32 to vector<16x128xf32>
    %192 = arith.mulf %140, %191 : vector<16x128xf32>
    %193 = arith.addf %189, %192 : vector<16x128xf32>
    %c0_91 = arith.constant 0 : index
    %c9_92 = arith.constant 9 : index
    %194 = memref.load %arg5[%c0_91, %c9_92] : memref<5x10xf32, #tpu.memory_space<smem>>
    %195 = vector.broadcast %194 : f32 to vector<16x128xf32>
    %196 = arith.mulf %155, %195 : vector<16x128xf32>
    %197 = arith.addf %193, %196 : vector<16x128xf32>
    %198 = math.tanh %197 : vector<16x128xf32>
    %c1_93 = arith.constant 1 : index
    %c0_94 = arith.constant 0 : index
    %199 = memref.load %arg5[%c1_93, %c0_94] : memref<5x10xf32, #tpu.memory_space<smem>>
    %200 = vector.broadcast %199 : f32 to vector<16x128xf32>
    %201 = arith.mulf %20, %200 : vector<16x128xf32>
    %c1_95 = arith.constant 1 : index
    %202 = memref.load %arg6[%c1_95] : memref<5xf32, #tpu.memory_space<smem>>
    %203 = vector.broadcast %202 : f32 to vector<16x128xf32>
    %204 = arith.addf %201, %203 : vector<16x128xf32>
    %c1_96 = arith.constant 1 : index
    %c1_97 = arith.constant 1 : index
    %205 = memref.load %arg5[%c1_96, %c1_97] : memref<5x10xf32, #tpu.memory_space<smem>>
    %206 = vector.broadcast %205 : f32 to vector<16x128xf32>
    %207 = arith.mulf %35, %206 : vector<16x128xf32>
    %208 = arith.addf %204, %207 : vector<16x128xf32>
    %c1_98 = arith.constant 1 : index
    %c2_99 = arith.constant 2 : index
    %209 = memref.load %arg5[%c1_98, %c2_99] : memref<5x10xf32, #tpu.memory_space<smem>>
    %210 = vector.broadcast %209 : f32 to vector<16x128xf32>
    %211 = arith.mulf %50, %210 : vector<16x128xf32>
    %212 = arith.addf %208, %211 : vector<16x128xf32>
    %c1_100 = arith.constant 1 : index
    %c3_101 = arith.constant 3 : index
    %213 = memref.load %arg5[%c1_100, %c3_101] : memref<5x10xf32, #tpu.memory_space<smem>>
    %214 = vector.broadcast %213 : f32 to vector<16x128xf32>
    %215 = arith.mulf %65, %214 : vector<16x128xf32>
    %216 = arith.addf %212, %215 : vector<16x128xf32>
    %c1_102 = arith.constant 1 : index
    %c4_103 = arith.constant 4 : index
    %217 = memref.load %arg5[%c1_102, %c4_103] : memref<5x10xf32, #tpu.memory_space<smem>>
    %218 = vector.broadcast %217 : f32 to vector<16x128xf32>
    %219 = arith.mulf %80, %218 : vector<16x128xf32>
    %220 = arith.addf %216, %219 : vector<16x128xf32>
    %c1_104 = arith.constant 1 : index
    %c5_105 = arith.constant 5 : index
    %221 = memref.load %arg5[%c1_104, %c5_105] : memref<5x10xf32, #tpu.memory_space<smem>>
    %222 = vector.broadcast %221 : f32 to vector<16x128xf32>
    %223 = arith.mulf %95, %222 : vector<16x128xf32>
    %224 = arith.addf %220, %223 : vector<16x128xf32>
    %c1_106 = arith.constant 1 : index
    %c6_107 = arith.constant 6 : index
    %225 = memref.load %arg5[%c1_106, %c6_107] : memref<5x10xf32, #tpu.memory_space<smem>>
    %226 = vector.broadcast %225 : f32 to vector<16x128xf32>
    %227 = arith.mulf %110, %226 : vector<16x128xf32>
    %228 = arith.addf %224, %227 : vector<16x128xf32>
    %c1_108 = arith.constant 1 : index
    %c7_109 = arith.constant 7 : index
    %229 = memref.load %arg5[%c1_108, %c7_109] : memref<5x10xf32, #tpu.memory_space<smem>>
    %230 = vector.broadcast %229 : f32 to vector<16x128xf32>
    %231 = arith.mulf %125, %230 : vector<16x128xf32>
    %232 = arith.addf %228, %231 : vector<16x128xf32>
    %c1_110 = arith.constant 1 : index
    %c8_111 = arith.constant 8 : index
    %233 = memref.load %arg5[%c1_110, %c8_111] : memref<5x10xf32, #tpu.memory_space<smem>>
    %234 = vector.broadcast %233 : f32 to vector<16x128xf32>
    %235 = arith.mulf %140, %234 : vector<16x128xf32>
    %236 = arith.addf %232, %235 : vector<16x128xf32>
    %c1_112 = arith.constant 1 : index
    %c9_113 = arith.constant 9 : index
    %237 = memref.load %arg5[%c1_112, %c9_113] : memref<5x10xf32, #tpu.memory_space<smem>>
    %238 = vector.broadcast %237 : f32 to vector<16x128xf32>
    %239 = arith.mulf %155, %238 : vector<16x128xf32>
    %240 = arith.addf %236, %239 : vector<16x128xf32>
    %241 = math.tanh %240 : vector<16x128xf32>
    %c2_114 = arith.constant 2 : index
    %c0_115 = arith.constant 0 : index
    %242 = memref.load %arg5[%c2_114, %c0_115] : memref<5x10xf32, #tpu.memory_space<smem>>
    %243 = vector.broadcast %242 : f32 to vector<16x128xf32>
    %244 = arith.mulf %20, %243 : vector<16x128xf32>
    %c2_116 = arith.constant 2 : index
    %245 = memref.load %arg6[%c2_116] : memref<5xf32, #tpu.memory_space<smem>>
    %246 = vector.broadcast %245 : f32 to vector<16x128xf32>
    %247 = arith.addf %244, %246 : vector<16x128xf32>
    %c2_117 = arith.constant 2 : index
    %c1_118 = arith.constant 1 : index
    %248 = memref.load %arg5[%c2_117, %c1_118] : memref<5x10xf32, #tpu.memory_space<smem>>
    %249 = vector.broadcast %248 : f32 to vector<16x128xf32>
    %250 = arith.mulf %35, %249 : vector<16x128xf32>
    %251 = arith.addf %247, %250 : vector<16x128xf32>
    %c2_119 = arith.constant 2 : index
    %c2_120 = arith.constant 2 : index
    %252 = memref.load %arg5[%c2_119, %c2_120] : memref<5x10xf32, #tpu.memory_space<smem>>
    %253 = vector.broadcast %252 : f32 to vector<16x128xf32>
    %254 = arith.mulf %50, %253 : vector<16x128xf32>
    %255 = arith.addf %251, %254 : vector<16x128xf32>
    %c2_121 = arith.constant 2 : index
    %c3_122 = arith.constant 3 : index
    %256 = memref.load %arg5[%c2_121, %c3_122] : memref<5x10xf32, #tpu.memory_space<smem>>
    %257 = vector.broadcast %256 : f32 to vector<16x128xf32>
    %258 = arith.mulf %65, %257 : vector<16x128xf32>
    %259 = arith.addf %255, %258 : vector<16x128xf32>
    %c2_123 = arith.constant 2 : index
    %c4_124 = arith.constant 4 : index
    %260 = memref.load %arg5[%c2_123, %c4_124] : memref<5x10xf32, #tpu.memory_space<smem>>
    %261 = vector.broadcast %260 : f32 to vector<16x128xf32>
    %262 = arith.mulf %80, %261 : vector<16x128xf32>
    %263 = arith.addf %259, %262 : vector<16x128xf32>
    %c2_125 = arith.constant 2 : index
    %c5_126 = arith.constant 5 : index
    %264 = memref.load %arg5[%c2_125, %c5_126] : memref<5x10xf32, #tpu.memory_space<smem>>
    %265 = vector.broadcast %264 : f32 to vector<16x128xf32>
    %266 = arith.mulf %95, %265 : vector<16x128xf32>
    %267 = arith.addf %263, %266 : vector<16x128xf32>
    %c2_127 = arith.constant 2 : index
    %c6_128 = arith.constant 6 : index
    %268 = memref.load %arg5[%c2_127, %c6_128] : memref<5x10xf32, #tpu.memory_space<smem>>
    %269 = vector.broadcast %268 : f32 to vector<16x128xf32>
    %270 = arith.mulf %110, %269 : vector<16x128xf32>
    %271 = arith.addf %267, %270 : vector<16x128xf32>
    %c2_129 = arith.constant 2 : index
    %c7_130 = arith.constant 7 : index
    %272 = memref.load %arg5[%c2_129, %c7_130] : memref<5x10xf32, #tpu.memory_space<smem>>
    %273 = vector.broadcast %272 : f32 to vector<16x128xf32>
    %274 = arith.mulf %125, %273 : vector<16x128xf32>
    %275 = arith.addf %271, %274 : vector<16x128xf32>
    %c2_131 = arith.constant 2 : index
    %c8_132 = arith.constant 8 : index
    %276 = memref.load %arg5[%c2_131, %c8_132] : memref<5x10xf32, #tpu.memory_space<smem>>
    %277 = vector.broadcast %276 : f32 to vector<16x128xf32>
    %278 = arith.mulf %140, %277 : vector<16x128xf32>
    %279 = arith.addf %275, %278 : vector<16x128xf32>
    %c2_133 = arith.constant 2 : index
    %c9_134 = arith.constant 9 : index
    %280 = memref.load %arg5[%c2_133, %c9_134] : memref<5x10xf32, #tpu.memory_space<smem>>
    %281 = vector.broadcast %280 : f32 to vector<16x128xf32>
    %282 = arith.mulf %155, %281 : vector<16x128xf32>
    %283 = arith.addf %279, %282 : vector<16x128xf32>
    %284 = math.tanh %283 : vector<16x128xf32>
    %c3_135 = arith.constant 3 : index
    %c0_136 = arith.constant 0 : index
    %285 = memref.load %arg5[%c3_135, %c0_136] : memref<5x10xf32, #tpu.memory_space<smem>>
    %286 = vector.broadcast %285 : f32 to vector<16x128xf32>
    %287 = arith.mulf %20, %286 : vector<16x128xf32>
    %c3_137 = arith.constant 3 : index
    %288 = memref.load %arg6[%c3_137] : memref<5xf32, #tpu.memory_space<smem>>
    %289 = vector.broadcast %288 : f32 to vector<16x128xf32>
    %290 = arith.addf %287, %289 : vector<16x128xf32>
    %c3_138 = arith.constant 3 : index
    %c1_139 = arith.constant 1 : index
    %291 = memref.load %arg5[%c3_138, %c1_139] : memref<5x10xf32, #tpu.memory_space<smem>>
    %292 = vector.broadcast %291 : f32 to vector<16x128xf32>
    %293 = arith.mulf %35, %292 : vector<16x128xf32>
    %294 = arith.addf %290, %293 : vector<16x128xf32>
    %c3_140 = arith.constant 3 : index
    %c2_141 = arith.constant 2 : index
    %295 = memref.load %arg5[%c3_140, %c2_141] : memref<5x10xf32, #tpu.memory_space<smem>>
    %296 = vector.broadcast %295 : f32 to vector<16x128xf32>
    %297 = arith.mulf %50, %296 : vector<16x128xf32>
    %298 = arith.addf %294, %297 : vector<16x128xf32>
    %c3_142 = arith.constant 3 : index
    %c3_143 = arith.constant 3 : index
    %299 = memref.load %arg5[%c3_142, %c3_143] : memref<5x10xf32, #tpu.memory_space<smem>>
    %300 = vector.broadcast %299 : f32 to vector<16x128xf32>
    %301 = arith.mulf %65, %300 : vector<16x128xf32>
    %302 = arith.addf %298, %301 : vector<16x128xf32>
    %c3_144 = arith.constant 3 : index
    %c4_145 = arith.constant 4 : index
    %303 = memref.load %arg5[%c3_144, %c4_145] : memref<5x10xf32, #tpu.memory_space<smem>>
    %304 = vector.broadcast %303 : f32 to vector<16x128xf32>
    %305 = arith.mulf %80, %304 : vector<16x128xf32>
    %306 = arith.addf %302, %305 : vector<16x128xf32>
    %c3_146 = arith.constant 3 : index
    %c5_147 = arith.constant 5 : index
    %307 = memref.load %arg5[%c3_146, %c5_147] : memref<5x10xf32, #tpu.memory_space<smem>>
    %308 = vector.broadcast %307 : f32 to vector<16x128xf32>
    %309 = arith.mulf %95, %308 : vector<16x128xf32>
    %310 = arith.addf %306, %309 : vector<16x128xf32>
    %c3_148 = arith.constant 3 : index
    %c6_149 = arith.constant 6 : index
    %311 = memref.load %arg5[%c3_148, %c6_149] : memref<5x10xf32, #tpu.memory_space<smem>>
    %312 = vector.broadcast %311 : f32 to vector<16x128xf32>
    %313 = arith.mulf %110, %312 : vector<16x128xf32>
    %314 = arith.addf %310, %313 : vector<16x128xf32>
    %c3_150 = arith.constant 3 : index
    %c7_151 = arith.constant 7 : index
    %315 = memref.load %arg5[%c3_150, %c7_151] : memref<5x10xf32, #tpu.memory_space<smem>>
    %316 = vector.broadcast %315 : f32 to vector<16x128xf32>
    %317 = arith.mulf %125, %316 : vector<16x128xf32>
    %318 = arith.addf %314, %317 : vector<16x128xf32>
    %c3_152 = arith.constant 3 : index
    %c8_153 = arith.constant 8 : index
    %319 = memref.load %arg5[%c3_152, %c8_153] : memref<5x10xf32, #tpu.memory_space<smem>>
    %320 = vector.broadcast %319 : f32 to vector<16x128xf32>
    %321 = arith.mulf %140, %320 : vector<16x128xf32>
    %322 = arith.addf %318, %321 : vector<16x128xf32>
    %c3_154 = arith.constant 3 : index
    %c9_155 = arith.constant 9 : index
    %323 = memref.load %arg5[%c3_154, %c9_155] : memref<5x10xf32, #tpu.memory_space<smem>>
    %324 = vector.broadcast %323 : f32 to vector<16x128xf32>
    %325 = arith.mulf %155, %324 : vector<16x128xf32>
    %326 = arith.addf %322, %325 : vector<16x128xf32>
    %327 = math.tanh %326 : vector<16x128xf32>
    %c4_156 = arith.constant 4 : index
    %c0_157 = arith.constant 0 : index
    %328 = memref.load %arg5[%c4_156, %c0_157] : memref<5x10xf32, #tpu.memory_space<smem>>
    %329 = vector.broadcast %328 : f32 to vector<16x128xf32>
    %330 = arith.mulf %20, %329 : vector<16x128xf32>
    %c4_158 = arith.constant 4 : index
    %331 = memref.load %arg6[%c4_158] : memref<5xf32, #tpu.memory_space<smem>>
    %332 = vector.broadcast %331 : f32 to vector<16x128xf32>
    %333 = arith.addf %330, %332 : vector<16x128xf32>
    %c4_159 = arith.constant 4 : index
    %c1_160 = arith.constant 1 : index
    %334 = memref.load %arg5[%c4_159, %c1_160] : memref<5x10xf32, #tpu.memory_space<smem>>
    %335 = vector.broadcast %334 : f32 to vector<16x128xf32>
    %336 = arith.mulf %35, %335 : vector<16x128xf32>
    %337 = arith.addf %333, %336 : vector<16x128xf32>
    %c4_161 = arith.constant 4 : index
    %c2_162 = arith.constant 2 : index
    %338 = memref.load %arg5[%c4_161, %c2_162] : memref<5x10xf32, #tpu.memory_space<smem>>
    %339 = vector.broadcast %338 : f32 to vector<16x128xf32>
    %340 = arith.mulf %50, %339 : vector<16x128xf32>
    %341 = arith.addf %337, %340 : vector<16x128xf32>
    %c4_163 = arith.constant 4 : index
    %c3_164 = arith.constant 3 : index
    %342 = memref.load %arg5[%c4_163, %c3_164] : memref<5x10xf32, #tpu.memory_space<smem>>
    %343 = vector.broadcast %342 : f32 to vector<16x128xf32>
    %344 = arith.mulf %65, %343 : vector<16x128xf32>
    %345 = arith.addf %341, %344 : vector<16x128xf32>
    %c4_165 = arith.constant 4 : index
    %c4_166 = arith.constant 4 : index
    %346 = memref.load %arg5[%c4_165, %c4_166] : memref<5x10xf32, #tpu.memory_space<smem>>
    %347 = vector.broadcast %346 : f32 to vector<16x128xf32>
    %348 = arith.mulf %80, %347 : vector<16x128xf32>
    %349 = arith.addf %345, %348 : vector<16x128xf32>
    %c4_167 = arith.constant 4 : index
    %c5_168 = arith.constant 5 : index
    %350 = memref.load %arg5[%c4_167, %c5_168] : memref<5x10xf32, #tpu.memory_space<smem>>
    %351 = vector.broadcast %350 : f32 to vector<16x128xf32>
    %352 = arith.mulf %95, %351 : vector<16x128xf32>
    %353 = arith.addf %349, %352 : vector<16x128xf32>
    %c4_169 = arith.constant 4 : index
    %c6_170 = arith.constant 6 : index
    %354 = memref.load %arg5[%c4_169, %c6_170] : memref<5x10xf32, #tpu.memory_space<smem>>
    %355 = vector.broadcast %354 : f32 to vector<16x128xf32>
    %356 = arith.mulf %110, %355 : vector<16x128xf32>
    %357 = arith.addf %353, %356 : vector<16x128xf32>
    %c4_171 = arith.constant 4 : index
    %c7_172 = arith.constant 7 : index
    %358 = memref.load %arg5[%c4_171, %c7_172] : memref<5x10xf32, #tpu.memory_space<smem>>
    %359 = vector.broadcast %358 : f32 to vector<16x128xf32>
    %360 = arith.mulf %125, %359 : vector<16x128xf32>
    %361 = arith.addf %357, %360 : vector<16x128xf32>
    %c4_173 = arith.constant 4 : index
    %c8_174 = arith.constant 8 : index
    %362 = memref.load %arg5[%c4_173, %c8_174] : memref<5x10xf32, #tpu.memory_space<smem>>
    %363 = vector.broadcast %362 : f32 to vector<16x128xf32>
    %364 = arith.mulf %140, %363 : vector<16x128xf32>
    %365 = arith.addf %361, %364 : vector<16x128xf32>
    %c4_175 = arith.constant 4 : index
    %c9_176 = arith.constant 9 : index
    %366 = memref.load %arg5[%c4_175, %c9_176] : memref<5x10xf32, #tpu.memory_space<smem>>
    %367 = vector.broadcast %366 : f32 to vector<16x128xf32>
    %368 = arith.mulf %155, %367 : vector<16x128xf32>
    %369 = arith.addf %365, %368 : vector<16x128xf32>
    %370 = math.tanh %369 : vector<16x128xf32>
    %c0_177 = arith.constant 0 : index
    %c0_178 = arith.constant 0 : index
    %371 = memref.load %arg7[%c0_177, %c0_178] : memref<2x5xf32, #tpu.memory_space<smem>>
    %372 = vector.broadcast %371 : f32 to vector<16x128xf32>
    %373 = arith.mulf %198, %372 : vector<16x128xf32>
    %c0_179 = arith.constant 0 : index
    %374 = memref.load %arg8[%c0_179] : memref<2xf32, #tpu.memory_space<smem>>
    %375 = vector.broadcast %374 : f32 to vector<16x128xf32>
    %376 = arith.addf %373, %375 : vector<16x128xf32>
    %c0_180 = arith.constant 0 : index
    %c1_181 = arith.constant 1 : index
    %377 = memref.load %arg7[%c0_180, %c1_181] : memref<2x5xf32, #tpu.memory_space<smem>>
    %378 = vector.broadcast %377 : f32 to vector<16x128xf32>
    %379 = arith.mulf %241, %378 : vector<16x128xf32>
    %380 = arith.addf %376, %379 : vector<16x128xf32>
    %c0_182 = arith.constant 0 : index
    %c2_183 = arith.constant 2 : index
    %381 = memref.load %arg7[%c0_182, %c2_183] : memref<2x5xf32, #tpu.memory_space<smem>>
    %382 = vector.broadcast %381 : f32 to vector<16x128xf32>
    %383 = arith.mulf %284, %382 : vector<16x128xf32>
    %384 = arith.addf %380, %383 : vector<16x128xf32>
    %c0_184 = arith.constant 0 : index
    %c3_185 = arith.constant 3 : index
    %385 = memref.load %arg7[%c0_184, %c3_185] : memref<2x5xf32, #tpu.memory_space<smem>>
    %386 = vector.broadcast %385 : f32 to vector<16x128xf32>
    %387 = arith.mulf %327, %386 : vector<16x128xf32>
    %388 = arith.addf %384, %387 : vector<16x128xf32>
    %c0_186 = arith.constant 0 : index
    %c4_187 = arith.constant 4 : index
    %389 = memref.load %arg7[%c0_186, %c4_187] : memref<2x5xf32, #tpu.memory_space<smem>>
    %390 = vector.broadcast %389 : f32 to vector<16x128xf32>
    %391 = arith.mulf %370, %390 : vector<16x128xf32>
    %392 = arith.addf %388, %391 : vector<16x128xf32>
    %393 = math.tanh %392 : vector<16x128xf32>
    %c1_188 = arith.constant 1 : index
    %c0_189 = arith.constant 0 : index
    %394 = memref.load %arg7[%c1_188, %c0_189] : memref<2x5xf32, #tpu.memory_space<smem>>
    %395 = vector.broadcast %394 : f32 to vector<16x128xf32>
    %396 = arith.mulf %198, %395 : vector<16x128xf32>
    %c1_190 = arith.constant 1 : index
    %397 = memref.load %arg8[%c1_190] : memref<2xf32, #tpu.memory_space<smem>>
    %398 = vector.broadcast %397 : f32 to vector<16x128xf32>
    %399 = arith.addf %396, %398 : vector<16x128xf32>
    %c1_191 = arith.constant 1 : index
    %c1_192 = arith.constant 1 : index
    %400 = memref.load %arg7[%c1_191, %c1_192] : memref<2x5xf32, #tpu.memory_space<smem>>
    %401 = vector.broadcast %400 : f32 to vector<16x128xf32>
    %402 = arith.mulf %241, %401 : vector<16x128xf32>
    %403 = arith.addf %399, %402 : vector<16x128xf32>
    %c1_193 = arith.constant 1 : index
    %c2_194 = arith.constant 2 : index
    %404 = memref.load %arg7[%c1_193, %c2_194] : memref<2x5xf32, #tpu.memory_space<smem>>
    %405 = vector.broadcast %404 : f32 to vector<16x128xf32>
    %406 = arith.mulf %284, %405 : vector<16x128xf32>
    %407 = arith.addf %403, %406 : vector<16x128xf32>
    %c1_195 = arith.constant 1 : index
    %c3_196 = arith.constant 3 : index
    %408 = memref.load %arg7[%c1_195, %c3_196] : memref<2x5xf32, #tpu.memory_space<smem>>
    %409 = vector.broadcast %408 : f32 to vector<16x128xf32>
    %410 = arith.mulf %327, %409 : vector<16x128xf32>
    %411 = arith.addf %407, %410 : vector<16x128xf32>
    %c1_197 = arith.constant 1 : index
    %c4_198 = arith.constant 4 : index
    %412 = memref.load %arg7[%c1_197, %c4_198] : memref<2x5xf32, #tpu.memory_space<smem>>
    %413 = vector.broadcast %412 : f32 to vector<16x128xf32>
    %414 = arith.mulf %370, %413 : vector<16x128xf32>
    %415 = arith.addf %411, %414 : vector<16x128xf32>
    %416 = math.tanh %415 : vector<16x128xf32>
    %c0_199 = arith.constant 0 : index
    %c0_200 = arith.constant 0 : index
    %c0_201 = arith.constant 0 : index
    %c0_202 = arith.constant 0 : index
    %417 = vector.load %arg9[%c0_199, %c0_200, %c0_201, %c0_202] : memref<1x2x16x128xf32, #tpu.memory_space<vmem>>, vector<1x1x16x128xf32>
    %418 = vector.shape_cast %417 : vector<1x1x16x128xf32> to vector<16x128xf32>
    %419 = vector.shape_cast %393 : vector<16x128xf32> to vector<1x1x16x128xf32>
    tpu.vector_store %arg9[%c0_199, %c0_200, %c0_201, %c0_202], %419 {strides = array<i32>} : memref<1x2x16x128xf32, #tpu.memory_space<vmem>>, vector<1x1x16x128xf32>,
    %c0_203 = arith.constant 0 : index
    %c1_204 = arith.constant 1 : index
    %c0_205 = arith.constant 0 : index
    %c0_206 = arith.constant 0 : index
    %420 = vector.load %arg9[%c0_203, %c1_204, %c0_205, %c0_206] : memref<1x2x16x128xf32, #tpu.memory_space<vmem>>, vector<1x1x16x128xf32>
    %421 = vector.shape_cast %420 : vector<1x1x16x128xf32> to vector<16x128xf32>
    %422 = vector.shape_cast %416 : vector<16x128xf32> to vector<1x1x16x128xf32>
    tpu.vector_store %arg9[%c0_203, %c1_204, %c0_205, %c0_206], %422 {strides = array<i32>} : memref<1x2x16x128xf32, #tpu.memory_space<vmem>>, vector<1x1x16x128xf32>,
    return
  }
  func.func @transform_0(%arg0: i32, %arg1: i32) -> (i32, i32, i32, i32) {
    %c0_i32 = arith.constant 0 : i32
    %c0_i32_0 = arith.constant 0 : i32
    %c0_i32_1 = arith.constant 0 : i32
    return %arg0, %c0_i32, %arg1, %c0_i32_0 : i32, i32, i32, i32
  }
  func.func @transform_1(%arg0: i32, %arg1: i32) -> (i32, i32) {
    %c0_i32 = arith.constant 0 : i32
    %c0_i32_0 = arith.constant 0 : i32
    %c0_i32_1 = arith.constant 0 : i32
    return %c0_i32, %c0_i32_0 : i32, i32
  }
  func.func @transform_2(%arg0: i32, %arg1: i32) -> i32 {
    %c0_i32 = arith.constant 0 : i32
    %c0_i32_0 = arith.constant 0 : i32
    return %c0_i32 : i32
  }
  func.func @transform_3(%arg0: i32, %arg1: i32) -> (i32, i32) {
    %c0_i32 = arith.constant 0 : i32
    %c0_i32_0 = arith.constant 0 : i32
    %c0_i32_1 = arith.constant 0 : i32
    return %c0_i32, %c0_i32_0 : i32, i32
  }
  func.func @transform_4(%arg0: i32, %arg1: i32) -> i32 {
    %c0_i32 = arith.constant 0 : i32
    %c0_i32_0 = arith.constant 0 : i32
    return %c0_i32 : i32
  }
  func.func @transform_5(%arg0: i32, %arg1: i32) -> (i32, i32) {
    %c0_i32 = arith.constant 0 : i32
    %c0_i32_0 = arith.constant 0 : i32
    %c0_i32_1 = arith.constant 0 : i32
    return %c0_i32, %c0_i32_0 : i32, i32
  }
  func.func @transform_6(%arg0: i32, %arg1: i32) -> i32 {
    %c0_i32 = arith.constant 0 : i32
    %c0_i32_0 = arith.constant 0 : i32
    return %c0_i32 : i32
  }
  func.func @transform_7(%arg0: i32, %arg1: i32) -> (i32, i32, i32, i32) {
    %c0_i32 = arith.constant 0 : i32
    %c0_i32_0 = arith.constant 0 : i32
    %c0_i32_1 = arith.constant 0 : i32
    return %arg0, %c0_i32, %arg1, %c0_i32_0 : i32, i32, i32, i32
  }
}

</mosaic_0001>

<llo_original>
// kernel: tpu_custom_call.1
$region0: #{tpu_custom_call.1}
  #allocation0 [shape = 'u32[]', space=smem, size = 0x4, offset = 0x4, fixed_abs, tag = 'smem constant byte address 0x4 - core index']
  #allocation1 [shape = 'u32[72,128]{1,0:T(1,128)}', space=vmem, size = 0x9000, scoped, tag = 'internal scratch']
  #allocation16 [shape = 's32[]', space=sflag, size = 0x4, offset = 0, fixed_abs, tag = 'sflag constant byte address 0x0 - dummy sync flag']
  #allocation18 [shape = 's32[]', space=sflag, size = 0x4, offset = 0, fixed_abs, tag = 'sflag constant byte address 0x0 - dummy sync flag']
  %s0 = inlined_call_operand.hbm [shape: f32[1,3,32,128], index: 0, kind: input, shape index: {}]
  %s1 = inlined_call_operand.vmem [shape: f32[10,3], index: 1, kind: input, shape index: {}]
  %s2 = inlined_call_operand.vmem [shape: f32[10], index: 2, kind: input, shape index: {}]
  %s3 = inlined_call_operand.vmem [shape: f32[5,10], index: 3, kind: input, shape index: {}]
  %s4 = inlined_call_operand.vmem [shape: f32[5], index: 4, kind: input, shape index: {}]
  %s5 = inlined_call_operand.vmem [shape: f32[2,5], index: 5, kind: input, shape index: {}]
  %s6 = inlined_call_operand.vmem [shape: f32[2], index: 6, kind: input, shape index: {}]
  %s7 = inlined_call_operand.hbm [shape: f32[1,2,32,128], index: 7, kind: output, shape index: {}]
  %s8 = sld [smem:[#allocation0]]
  $region89: #{tpu_custom_call.1} parent=0
    _
  %s10 = ssub.s32 1, %s8
  %s11 = scalar_select 0, %s10, %s8
  $region1: #{tpu_custom_call.1} parent=0
    #allocation2 [shape = 'u8[49152]{0}', space=vmem, size = 0xc000, scoped, tag = 'input window, operand 0']
    #allocation3 [shape = 's32[2]{0}', space=sflag, size = 0x8, scoped, tag = 'scoped memory for tpu_custom_call.1']
    #allocation4 [shape = 's32[2]{0}', space=sflag, size = 0x8, scoped, tag = 'scoped memory for tpu_custom_call.1']
    #allocation5 [shape = 's32[2]{0}', space=sflag, size = 0x8, scoped, tag = 'scoped memory for tpu_custom_call.1']
    #allocation6 [shape = 'u8[8192]{0}', space=smem, size = 0x2000, scoped, tag = 'input window, operand 1, single buffered']
    #allocation7 [shape = 'u8[512]{0}', space=smem, size = 0x200, scoped, tag = 'input window, operand 2, single buffered']
    #allocation8 [shape = 's32[1]{0}', space=sflag, size = 0x4, scoped, tag = 'scoped memory for tpu_custom_call.1']
    #allocation9 [shape = 'u8[4096]{0}', space=smem, size = 0x1000, scoped, tag = 'input window, operand 3, single buffered']
    #allocation10 [shape = 'u8[512]{0}', space=smem, size = 0x200, scoped, tag = 'input window, operand 4, single buffered']
    #allocation11 [shape = 's32[1]{0}', space=sflag, size = 0x4, scoped, tag = 'scoped memory for tpu_custom_call.1']
    #allocation12 [shape = 'u8[1024]{0}', space=smem, size = 0x400, scoped, tag = 'input window, operand 5, single buffered']
    #allocation13 [shape = 'u8[512]{0}', space=smem, size = 0x200, scoped, tag = 'input window, operand 6, single buffered']
    #allocation14 [shape = 's32[1]{0}', space=sflag, size = 0x4, scoped, tag = 'scoped memory for tpu_custom_call.1']
    #allocation15 [shape = 'u8[32768]{0}', space=vmem, size = 0x8000, scoped, tag = 'output window, operand 0']
    %12 = vsyncpa [#allocation3], 0
    %s13 = scalar_lea.sflag [#allocation3], 1
    %14 = vsyncpa %s13, 0
    %15 = vsyncpa [#allocation5], 0
    %16 = vsyncpa [#allocation8], 0
    %17 = vsyncpa [#allocation11], 0
    %18 = vsyncpa [#allocation14], 0
    %19 = vsyncpa [#allocation4], 0
    %s20 = scalar_lea.sflag [#allocation4], 1
    %21 = vsyncpa %s20, 0
    loop: start=0, step=1, limit=4
    $region2: #{tpu_custom_call.1} parent=1 // loop_pre_header
      _
    $region3: #{tpu_custom_call.1} parent=1 // loop_header
      %s23 = sphi 0, %s27
      %p24 = scmp.ge.s32.totalorder %s23, 4
      %s30 = sphi 0, %s42
      %s31 = sphi 0, %s38
      %s32 = sphi 0, %s30
      %s33 = sphi 0, %s31
      %s34 = sphi 0, %s32
      %s35 = sphi 0, %s33
      %s47 = sphi 0, %s49
      %s50 = sphi 0, %s47
      %s51 = sphi 0, %s50
      %s67 = sphi 0, %s51
      %s71 = sphi 0, %s71
      %s73 = sphi 0, %s71
      %s74 = sphi 0, %s73
      %s88 = sphi 0, %s74
      %s92 = sphi 0, %s92
      %s94 = sphi 0, %s92
      %s95 = sphi 0, %s94
      %s109 = sphi 0, %s95
      %s113 = sphi 0, %s113
      %s115 = sphi 0, %s113
      %s116 = sphi 0, %s115
      %s130 = sphi 0, %s116
      %s134 = sphi 0, %s134
      %s136 = sphi 0, %s134
      %s137 = sphi 0, %s136
      %s151 = sphi 0, %s137
      %s155 = sphi 0, %s155
      %s157 = sphi 0, %s155
      %s158 = sphi 0, %s157
      %s172 = sphi 0, %s158
      %s176 = sphi 0, %s176
      %s178 = sphi 0, %s176
      %s179 = sphi 0, %s178
      %s193 = sphi 0, %s179
      %s201 = sphi 0, %s203
      %s204 = sphi 0, %s201
      %s205 = sphi 0, %s204
      %s221 = sphi 0, %s205
    $region4: #{tpu_custom_call.1} parent=1 // loop_header_branch
      %26 = sbr.rel (%p24) target = $region8
    $region5: #{tpu_custom_call.1} parent=1 // loop_body
      %s28 = ssub.s32 %s23, 1
      %s29 = ssub.s32 %s23, 2
      %s36 = sadd.s32 1, %s31
      %p37 = scmp.ge.s32.totalorder %s36, 2
      %s38 = scalar_select %p37, 0, %s36
      %s39 = sadd.s32 1, %s30
      %s40 = scalar_select %p37, %s39, %s30
      %p41 = scmp.ge.s32.totalorder %s40, 1
      %s42 = scalar_select %p41, 0, %s40
      %s43 = ssub.s32 %s30, %s42
      %s44 = ssub.s32 %s31, %s38
      %s45 = sor.u32 %s43, %s44
      %p46 = scmp.eq.s32.totalorder %s45, 0
      %s48 = sadd.s32 %s47, 1
      %s49 = scalar_select %p46, %s47, %s48
      %p52 = pneg %p46
      %p53 = scmp.eq.s32.totalorder %s23, 1
      %p54 = por %p52, %p53
      %p55 = scmp.ne.s32.totalorder %s47, %s50
      %p56 = scmp.eq.s32.totalorder %s23, 0
      %p57 = por %p55, %p56
      %p58 = scmp.ne.s32.totalorder %s47, %s50
      %p59 = scmp.eq.s32.totalorder %s28, 1
      %p60 = por %p58, %p59
      %p61 = scmp.ne.s32.totalorder %s50, %s51
      %p62 = scmp.eq.s32.totalorder %s28, 0
      %p63 = por %p61, %p62
      %p64 = scmp.ne.s32.totalorder %s50, %s51
      %p65 = scmp.eq.s32.totalorder %s29, 1
      %p66 = por %p64, %p65
      %p68 = scmp.ne.s32.totalorder %s51, %s67
      %p69 = scmp.eq.s32.totalorder %s29, 0
      %p70 = por %p68, %p69
      %s72 = sadd.s32 %s71, 1
      %p75 = scmp.eq.s32.totalorder %s23, 1
      %p76 = scmp.ne.s32.totalorder %s71, %s73
      %p77 = scmp.eq.s32.totalorder %s23, 0
      %p78 = por %p76, %p77
      %p79 = scmp.ne.s32.totalorder %s71, %s73
      %p80 = scmp.eq.s32.totalorder %s28, 1
      %p81 = por %p79, %p80
      %p82 = scmp.ne.s32.totalorder %s73, %s74
      %p83 = scmp.eq.s32.totalorder %s28, 0
      %p84 = por %p82, %p83
      %p85 = scmp.ne.s32.totalorder %s73, %s74
      %p86 = scmp.eq.s32.totalorder %s29, 1
      %p87 = por %p85, %p86
      %p89 = scmp.ne.s32.totalorder %s74, %s88
      %p90 = scmp.eq.s32.totalorder %s29, 0
      %p91 = por %p89, %p90
      %s93 = sadd.s32 %s92, 1
      %p96 = scmp.eq.s32.totalorder %s23, 1
      %p97 = scmp.ne.s32.totalorder %s92, %s94
      %p98 = scmp.eq.s32.totalorder %s23, 0
      %p99 = por %p97, %p98
      %p100 = scmp.ne.s32.totalorder %s92, %s94
      %p101 = scmp.eq.s32.totalorder %s28, 1
      %p102 = por %p100, %p101
      %p103 = scmp.ne.s32.totalorder %s94, %s95
      %p104 = scmp.eq.s32.totalorder %s28, 0
      %p105 = por %p103, %p104
      %p106 = scmp.ne.s32.totalorder %s94, %s95
      %p107 = scmp.eq.s32.totalorder %s29, 1
      %p108 = por %p106, %p107
      %p110 = scmp.ne.s32.totalorder %s95, %s109
      %p111 = scmp.eq.s32.totalorder %s29, 0
      %p112 = por %p110, %p111
      %s114 = sadd.s32 %s113, 1
      %p117 = scmp.eq.s32.totalorder %s23, 1
      %p118 = scmp.ne.s32.totalorder %s113, %s115
      %p119 = scmp.eq.s32.totalorder %s23, 0
      %p120 = por %p118, %p119
      %p121 = scmp.ne.s32.totalorder %s113, %s115
      %p122 = scmp.eq.s32.totalorder %s28, 1
      %p123 = por %p121, %p122
      %p124 = scmp.ne.s32.totalorder %s115, %s116
      %p125 = scmp.eq.s32.totalorder %s28, 0
      %p126 = por %p124, %p125
      %p127 = scmp.ne.s32.totalorder %s115, %s116
      %p128 = scmp.eq.s32.totalorder %s29, 1
      %p129 = por %p127, %p128
      %p131 = scmp.ne.s32.totalorder %s116, %s130
      %p132 = scmp.eq.s32.totalorder %s29, 0
      %p133 = por %p131, %p132
      %s135 = sadd.s32 %s134, 1
      %p138 = scmp.eq.s32.totalorder %s23, 1
      %p139 = scmp.ne.s32.totalorder %s134, %s136
      %p140 = scmp.eq.s32.totalorder %s23, 0
      %p141 = por %p139, %p140
      %p142 = scmp.ne.s32.totalorder %s134, %s136
      %p143 = scmp.eq.s32.totalorder %s28, 1
      %p144 = por %p142, %p143
      %p145 = scmp.ne.s32.totalorder %s136, %s137
      %p146 = scmp.eq.s32.totalorder %s28, 0
      %p147 = por %p145, %p146
      %p148 = scmp.ne.s32.totalorder %s136, %s137
      %p149 = scmp.eq.s32.totalorder %s29, 1
      %p150 = por %p148, %p149
      %p152 = scmp.ne.s32.totalorder %s137, %s151
      %p153 = scmp.eq.s32.totalorder %s29, 0
      %p154 = por %p152, %p153
      %s156 = sadd.s32 %s155, 1
      %p159 = scmp.eq.s32.totalorder %s23, 1
      %p160 = scmp.ne.s32.totalorder %s155, %s157
      %p161 = scmp.eq.s32.totalorder %s23, 0
      %p162 = por %p160, %p161
      %p163 = scmp.ne.s32.totalorder %s155, %s157
      %p164 = scmp.eq.s32.totalorder %s28, 1
      %p165 = por %p163, %p164
      %p166 = scmp.ne.s32.totalorder %s157, %s158
      %p167 = scmp.eq.s32.totalorder %s28, 0
      %p168 = por %p166, %p167
      %p169 = scmp.ne.s32.totalorder %s157, %s158
      %p170 = scmp.eq.s32.totalorder %s29, 1
      %p171 = por %p169, %p170
      %p173 = scmp.ne.s32.totalorder %s158, %s172
      %p174 = scmp.eq.s32.totalorder %s29, 0
      %p175 = por %p173, %p174
      %s177 = sadd.s32 %s176, 1
      %p180 = scmp.eq.s32.totalorder %s23, 1
      %p181 = scmp.ne.s32.totalorder %s176, %s178
      %p182 = scmp.eq.s32.totalorder %s23, 0
      %p183 = por %p181, %p182
      %p184 = scmp.ne.s32.totalorder %s176, %s178
      %p185 = scmp.eq.s32.totalorder %s28, 1
      %p186 = por %p184, %p185
      %p187 = scmp.ne.s32.totalorder %s178, %s179
      %p188 = scmp.eq.s32.totalorder %s28, 0
      %p189 = por %p187, %p188
      %p190 = scmp.ne.s32.totalorder %s178, %s179
      %p191 = scmp.eq.s32.totalorder %s29, 1
      %p192 = por %p190, %p191
      %p194 = scmp.ne.s32.totalorder %s179, %s193
      %p195 = scmp.eq.s32.totalorder %s29, 0
      %p196 = por %p194, %p195
      %s197 = ssub.s32 %s30, %s42
      %s198 = ssub.s32 %s31, %s38
      %s199 = sor.u32 %s197, %s198
      %p200 = scmp.eq.s32.totalorder %s199, 0
      %s202 = sadd.s32 %s201, 1
      %s203 = scalar_select %p200, %s201, %s202
      %p206 = pneg %p200
      %p207 = scmp.eq.s32.totalorder %s23, 1
      %p208 = por %p206, %p207
      %p209 = scmp.ne.s32.totalorder %s201, %s204
      %p210 = scmp.eq.s32.totalorder %s23, 0
      %p211 = por %p209, %p210
      %p212 = scmp.ne.s32.totalorder %s201, %s204
      %p213 = scmp.eq.s32.totalorder %s28, 1
      %p214 = por %p212, %p213
      %p215 = scmp.ne.s32.totalorder %s204, %s205
      %p216 = scmp.eq.s32.totalorder %s28, 0
      %p217 = por %p215, %p216
      %p218 = scmp.ne.s32.totalorder %s204, %s205
      %p219 = scmp.eq.s32.totalorder %s29, 1
      %p220 = por %p218, %p219
      %p222 = scmp.ne.s32.totalorder %s205, %s221
      %p223 = scmp.eq.s32.totalorder %s29, 0
      %p224 = por %p222, %p223
      %p225 = scmp.le.s32.totalorder 1, %s23
      %p226 = scmp.lt.s32.totalorder %s23, 3
      %p227 = pnand %p225, %p226
      %p228 = pneg %p227
      // Predicated region
      $region9: #{tpu_custom_call.1} parent=5 // pred_check
        _
      $region10: #{tpu_custom_call.1} parent=5 // pred_check_branch
        %230 = sbr.rel (%p227) target = $region12
      $region11: #{tpu_custom_call.1} parent=5 // pred_region
        %s231 = ssub.s32 %s23, 1
        // Predicated region
        $region13: #{tpu_custom_call.1} parent=11 // pred_check
          %p232 = pneg %p84
        $region14: #{tpu_custom_call.1} parent=11 // pred_check_branch
          %234 = sbr.rel (%p232) target = $region16
        $region15: #{tpu_custom_call.1} parent=11 // pred_region
          %236 = vsyncadd [#allocation5], 0
          %s237 = sshll.u32 %s1, 4
          %s238 = int_to_ptr.vmem [resolvable:$true] %s237
          %243 = dma.vmem_to_smem %s238, 256, [#allocation6], [#allocation5], 128, 128, 8
        $region16: #{tpu_custom_call.1} parent=11 // pred_fallthru
          _
        // Predicated region
        $region17: #{tpu_custom_call.1} parent=11 // pred_check
          %p244 = pneg %p105
        $region18: #{tpu_custom_call.1} parent=11 // pred_check_branch
          %246 = sbr.rel (%p244) target = $region20
        $region19: #{tpu_custom_call.1} parent=11 // pred_region
          %248 = vsyncadd [#allocation8], 0
          %s250 = sshll.u32 %s2, 4
          %s251 = int_to_ptr.vmem [resolvable:$true] %s250
          %253 = dma.vmem_to_smem %s251, 16, [#allocation7], [#allocation8]
        $region20: #{tpu_custom_call.1} parent=11 // pred_fallthru
          _
        // Predicated region
        $region21: #{tpu_custom_call.1} parent=11 // pred_check
          %p254 = pneg %p126
        $region22: #{tpu_custom_call.1} parent=11 // pred_check_branch
          %256 = sbr.rel (%p254) target = $region24
        $region23: #{tpu_custom_call.1} parent=11 // pred_region
          %258 = vsyncadd [#allocation8], 0
          %s260 = sshll.u32 %s3, 4
          %s261 = int_to_ptr.vmem [resolvable:$true] %s260
          %263 = dma.vmem_to_smem %s261, 128, [#allocation9], [#allocation8]
        $region24: #{tpu_custom_call.1} parent=11 // pred_fallthru
          _
        // Predicated region
        $region25: #{tpu_custom_call.1} parent=11 // pred_check
          %p264 = pneg %p147
        $region26: #{tpu_custom_call.1} parent=11 // pred_check_branch
          %266 = sbr.rel (%p264) target = $region28
        $region27: #{tpu_custom_call.1} parent=11 // pred_region
          %268 = vsyncadd [#allocation11], 0
          %s270 = sshll.u32 %s4, 4
          %s271 = int_to_ptr.vmem [resolvable:$true] %s270
          %273 = dma.vmem_to_smem %s271, 16, [#allocation10], [#allocation11]
        $region28: #{tpu_custom_call.1} parent=11 // pred_fallthru
          _
        // Predicated region
        $region29: #{tpu_custom_call.1} parent=11 // pred_check
          %p274 = pneg %p168
        $region30: #{tpu_custom_call.1} parent=11 // pred_check_branch
          %276 = sbr.rel (%p274) target = $region32
        $region31: #{tpu_custom_call.1} parent=11 // pred_region
          %278 = vsyncadd [#allocation11], 0
          %s280 = sshll.u32 %s5, 4
          %s281 = int_to_ptr.vmem [resolvable:$true] %s280
          %283 = dma.vmem_to_smem %s281, 32, [#allocation12], [#allocation11]
        $region32: #{tpu_custom_call.1} parent=11 // pred_fallthru
          _
        // Predicated region
        $region33: #{tpu_custom_call.1} parent=11 // pred_check
          %p284 = pneg %p189
        $region34: #{tpu_custom_call.1} parent=11 // pred_check_branch
          %286 = sbr.rel (%p284) target = $region36
        $region35: #{tpu_custom_call.1} parent=11 // pred_region
          %288 = vsyncadd [#allocation14], 0
          %s290 = sshll.u32 %s6, 4
          %s291 = int_to_ptr.vmem [resolvable:$true] %s290
          %293 = dma.vmem_to_smem %s291, 16, [#allocation13], [#allocation14]
        $region36: #{tpu_custom_call.1} parent=11 // pred_fallthru
          _
      $region12: #{tpu_custom_call.1} parent=5 // pred_fallthru
        _
      %p294 = scmp.lt.s32.totalorder %s23, 2
      // Predicated region
      $region37: #{tpu_custom_call.1} parent=5 // pred_check
        %p295 = pneg %p294
      $region38: #{tpu_custom_call.1} parent=5 // pred_check_branch
        %297 = sbr.rel (%p295) target = $region40
      $region39: #{tpu_custom_call.1} parent=5 // pred_region
        // Predicated region
        $region41: #{tpu_custom_call.1} parent=39 // pred_check
          %p298 = pneg %p57
        $region42: #{tpu_custom_call.1} parent=39 // pred_check_branch
          %300 = sbr.rel (%p298) target = $region44
        $region43: #{tpu_custom_call.1} parent=39 // pred_region
          #allocation17 [shape = 'u32[6]{0}', space=smem, size = 0x18, scoped, tag = 'DMA stride descriptor']
          %s301 = sand.u32 %s47, 1
          %s302 = scalar_lea.sflag [#allocation3], %s301
          %s303 = sand.u32 %s47, 1
          %s304 = smul.addr %s303, 48
          %s305 = scalar_lea.vmem [#allocation2], %s304
          %s306 = smul.u32 2, %s31
          %308 = vsyncadd %s302, 0
          %s309 = smul.addr %s30, 12
          %s310 = sadd.s32 %s306, %s309
          %s311 = smul.addr %s310, 8
          %s312 = scalar_lea.hbm %s0, %s311
          %s314 = sshll.u32 1, 14
          %s315 = sxor.u32 4294967295, %s314
          %s317 = sld [smem:[#allocation0]]
          %s318 = sadd.s32 2, %s317
          %s320 = sshll.u32 7, 26
          %s321 = sxor.u32 4294967295, %s320
          %s322 = sand.u32 0, %s321
          %s323 = sshll.u32 %s318, 26
          %s324 = sor.u32 %s322, %s323
          %s325 = sshll.u32 %s312, 4
          %s326 = int_to_ptr.hbm [resolvable:$true] %s325
          %s327 = sshll.u32 %s305, 4
          %s328 = int_to_ptr.vmem [resolvable:$true] %s327
          %334 = sst [smem:[#allocation17]] 512
          %s335 = scalar_lea.smem [#allocation17], 1
          %336 = sst [smem:[%s335]] 256
          %s337 = scalar_lea.smem [#allocation17], 2
          %338 = sst [smem:[%s337]] 2
          %s339 = scalar_lea.smem [#allocation17], 3
          %340 = sst [smem:[%s339]] 128
          %s341 = scalar_lea.smem [#allocation17], 4
          %342 = sst [smem:[%s341]] 128
          %s343 = scalar_lea.smem [#allocation17], 5
          %344 = sst [smem:[%s343]] 8
          %346 = dma.general %s326, 768, %s328, %s302, [#allocation16], [#allocation17], %s324, 0
        $region44: #{tpu_custom_call.1} parent=39 // pred_fallthru
          _
      $region40: #{tpu_custom_call.1} parent=5 // pred_fallthru
        _
      %p347 = scmp.le.s32.totalorder 1, %s23
      %p348 = scmp.lt.s32.totalorder %s23, 3
      %p349 = pnand %p347, %p348
      %p350 = pneg %p349
      // Predicated region
      $region45: #{tpu_custom_call.1} parent=5 // pred_check
        _
      $region46: #{tpu_custom_call.1} parent=5 // pred_check_branch
        %352 = sbr.rel (%p349) target = $region48
      $region47: #{tpu_custom_call.1} parent=5 // pred_region
        %s353 = ssub.s32 %s23, 1
        %s354 = sand.u32 %s50, 1
        %s355 = scalar_lea.sflag [#allocation3], %s354
        %s356 = sand.u32 %s50, 1
        %s357 = smul.addr %s356, 48
        %s358 = scalar_lea.vmem [#allocation2], %s357
        // Predicated region
        $region49: #{tpu_custom_call.1} parent=47 // pred_check
          %p359 = pneg %p63
        $region50: #{tpu_custom_call.1} parent=47 // pred_check_branch
          %361 = sbr.rel (%p359) target = $region52
        $region51: #{tpu_custom_call.1} parent=47 // pred_region
          %363 = dma.done %s355, 768
        $region52: #{tpu_custom_call.1} parent=47 // pred_fallthru
          _
        // Predicated region
        $region53: #{tpu_custom_call.1} parent=47 // pred_check
          %p364 = pneg %p84
        $region54: #{tpu_custom_call.1} parent=47 // pred_check_branch
          %366 = sbr.rel (%p364) target = $region56
        $region55: #{tpu_custom_call.1} parent=47 // pred_region
          %368 = dma.done [#allocation5], 256
        $region56: #{tpu_custom_call.1} parent=47 // pred_fallthru
          _
        // Predicated region
        $region57: #{tpu_custom_call.1} parent=47 // pred_check
          %p369 = pneg %p105
        $region58: #{tpu_custom_call.1} parent=47 // pred_check_branch
          %371 = sbr.rel (%p369) target = $region60
        $region59: #{tpu_custom_call.1} parent=47 // pred_region
          %373 = dma.done [#allocation8], 16
        $region60: #{tpu_custom_call.1} parent=47 // pred_fallthru
          _
        // Predicated region
        $region61: #{tpu_custom_call.1} parent=47 // pred_check
          %p374 = pneg %p126
        $region62: #{tpu_custom_call.1} parent=47 // pred_check_branch
          %376 = sbr.rel (%p374) target = $region64
        $region63: #{tpu_custom_call.1} parent=47 // pred_region
          %378 = dma.done [#allocation8], 128
        $region64: #{tpu_custom_call.1} parent=47 // pred_fallthru
          _
        // Predicated region
        $region65: #{tpu_custom_call.1} parent=47 // pred_check
          %p379 = pneg %p147
        $region66: #{tpu_custom_call.1} parent=47 // pred_check_branch
          %381 = sbr.rel (%p379) target = $region68
        $region67: #{tpu_custom_call.1} parent=47 // pred_region
          %383 = dma.done [#allocation11], 16
        $region68: #{tpu_custom_call.1} parent=47 // pred_fallthru
          _
        // Predicated region
        $region69: #{tpu_custom_call.1} parent=47 // pred_check
          %p384 = pneg %p168
        $region70: #{tpu_custom_call.1} parent=47 // pred_check_branch
          %386 = sbr.rel (%p384) target = $region72
        $region71: #{tpu_custom_call.1} parent=47 // pred_region
          %388 = dma.done [#allocation11], 32
        $region72: #{tpu_custom_call.1} parent=47 // pred_fallthru
          _
        // Predicated region
        $region73: #{tpu_custom_call.1} parent=47 // pred_check
          %p389 = pneg %p189
        $region74: #{tpu_custom_call.1} parent=47 // pred_check_branch
          %391 = sbr.rel (%p389) target = $region76
        $region75: #{tpu_custom_call.1} parent=47 // pred_region
          %393 = dma.done [#allocation14], 16
        $region76: #{tpu_custom_call.1} parent=47 // pred_fallthru
          _
        %394 = sfence
        %s395 = sand.u32 %s50, 1
        %s396 = scalar_lea.sflag [#allocation3], %s395
        %s397 = sand.u32 %s50, 1
        %s398 = smul.addr %s397, 48
        %s399 = scalar_lea.vmem [#allocation2], %s398
        %p400 = pneg %p63
        %p401 = pneg %p60
        %p402 = pneg %p84
        %p403 = pneg %p81
        %p404 = pneg %p105
        %p405 = pneg %p102
        %p406 = pneg %p126
        %p407 = pneg %p123
        %p408 = pneg %p147
        %p409 = pneg %p144
        %p410 = pneg %p168
        %p411 = pneg %p165
        %p412 = pneg %p189
        %p413 = pneg %p186
        %p414 = pneg %p217
        %p415 = pneg %p214
        %s416 = sand.u32 %s204, 1
        %s417 = scalar_lea.sflag [#allocation4], %s416
        %s418 = sand.u32 %s204, 1
        %s419 = smul.addr %s418, 32
        %s420 = scalar_lea.vmem [#allocation15], %s419
        %s421 = smul.u32 2, %s33
        %s422 = smul.u32 2, %s33
        %v423 = vld [vmem:[%s358] sm:$0xff]
        %v424 = vld [vmem:[%s358 + $0x8] sm:$0xff]
        %s425 = scalar_lea.vmem %s358, 16 [#allocation2]
        %v426 = vld [vmem:[%s425] sm:$0xff]
        %v427 = vld [vmem:[%s425 + $0x8] sm:$0xff]
        %s428 = scalar_lea.vmem %s358, 32 [#allocation2]
        %v429 = vld [vmem:[%s428] sm:$0xff]
        %v430 = vld [vmem:[%s428 + $0x8] sm:$0xff]
        %s431 = sld [smem:[#allocation6]]
        %v432 = vstv %s431
        %v433 = vmul.f32 %v423, %v432
        %v434 = vmul.f32 %v424, %v432
        %s435 = sld [smem:[#allocation7]]
        %v436 = vstv %s435
        %v437 = vadd.f32 %v433, %v436
        %v438 = vadd.f32 %v434, %v436
        %s439 = sld [smem:[#allocation6 + $0x1]]
        %v440 = vstv %s439
        %v441 = vmul.f32 %v426, %v440
        %v442 = vmul.f32 %v427, %v440
        %v443 = vadd.f32 %v437, %v441
        %v444 = vadd.f32 %v438, %v442
        %s445 = sld [smem:[#allocation6 + $0x2]]
        %v446 = vstv %s445
        %v447 = vmul.f32 %v429, %v446
        %v448 = vmul.f32 %v430, %v446
        %v449 = vadd.f32 %v443, %v447
        %v450 = vadd.f32 %v444, %v448
        %v451 = vtanh.pop %v449
        %v452 = vtanh.pop %v450
        %s453 = sld [smem:[#allocation6 + $0x80]]
        %v454 = vstv %s453
        %v455 = vmul.f32 %v423, %v454
        %v456 = vmul.f32 %v424, %v454
        %s457 = sld [smem:[#allocation7 + $0x1]]
        %v458 = vstv %s457
        %v459 = vadd.f32 %v455, %v458
        %v460 = vadd.f32 %v456, %v458
        %s461 = sld [smem:[#allocation6 + $0x81]]
        %v462 = vstv %s461
        %v463 = vmul.f32 %v426, %v462
        %v464 = vmul.f32 %v427, %v462
        %v465 = vadd.f32 %v459, %v463
        %v466 = vadd.f32 %v460, %v464
        %s467 = sld [smem:[#allocation6 + $0x82]]
        %v468 = vstv %s467
        %v469 = vmul.f32 %v429, %v468
        %v470 = vmul.f32 %v430, %v468
        %v471 = vadd.f32 %v465, %v469
        %v472 = vadd.f32 %v466, %v470
        %v473 = vtanh.pop %v471
        %v474 = vtanh.pop %v472
        %s475 = sld [smem:[#allocation6 + $0x100]]
        %v476 = vstv %s475
        %v477 = vmul.f32 %v423, %v476
        %v478 = vmul.f32 %v424, %v476
        %s479 = sld [smem:[#allocation7 + $0x2]]
        %v480 = vstv %s479
        %v481 = vadd.f32 %v477, %v480
        %v482 = vadd.f32 %v478, %v480
        %s483 = sld [smem:[#allocation6 + $0x101]]
        %v484 = vstv %s483
        %v485 = vmul.f32 %v426, %v484
        %v486 = vmul.f32 %v427, %v484
        %v487 = vadd.f32 %v481, %v485
        %v488 = vadd.f32 %v482, %v486
        %s489 = sld [smem:[#allocation6 + $0x102]]
        %v490 = vstv %s489
        %v491 = vmul.f32 %v429, %v490
        %v492 = vmul.f32 %v430, %v490
        %v493 = vadd.f32 %v487, %v491
        %v494 = vadd.f32 %v488, %v492
        %v495 = vtanh.pop %v493
        %v496 = vtanh.pop %v494
        %s497 = sld [smem:[#allocation6 + $0x180]]
        %v498 = vstv %s497
        %v499 = vmul.f32 %v423, %v498
        %v500 = vmul.f32 %v424, %v498
        %s501 = sld [smem:[#allocation7 + $0x3]]
        %v502 = vstv %s501
        %v503 = vadd.f32 %v499, %v502
        %v504 = vadd.f32 %v500, %v502
        %s505 = sld [smem:[#allocation6 + $0x181]]
        %v506 = vstv %s505
        %v507 = vmul.f32 %v426, %v506
        %v508 = vmul.f32 %v427, %v506
        %v509 = vadd.f32 %v503, %v507
        %v510 = vadd.f32 %v504, %v508
        %s511 = sld [smem:[#allocation6 + $0x182]]
        %v512 = vstv %s511
        %v513 = vmul.f32 %v429, %v512
        %v514 = vmul.f32 %v430, %v512
        %v515 = vadd.f32 %v509, %v513
        %v516 = vadd.f32 %v510, %v514
        %v517 = vtanh.pop %v515
        %v518 = vtanh.pop %v516
        %s519 = sld [smem:[#allocation6 + $0x200]]
        %v520 = vstv %s519
        %v521 = vmul.f32 %v423, %v520
        %v522 = vmul.f32 %v424, %v520
        %s523 = sld [smem:[#allocation7 + $0x4]]
        %v524 = vstv %s523
        %v525 = vadd.f32 %v521, %v524
        %v526 = vadd.f32 %v522, %v524
        %s527 = sld [smem:[#allocation6 + $0x201]]
        %v528 = vstv %s527
        %v529 = vmul.f32 %v426, %v528
        %v530 = vmul.f32 %v427, %v528
        %v531 = vadd.f32 %v525, %v529
        %v532 = vadd.f32 %v526, %v530
        %s533 = sld [smem:[#allocation6 + $0x202]]
        %v534 = vstv %s533
        %v535 = vmul.f32 %v429, %v534
        %v536 = vmul.f32 %v430, %v534
        %v537 = vadd.f32 %v531, %v535
        %v538 = vadd.f32 %v532, %v536
        %v539 = vtanh.pop %v537
        %v540 = vtanh.pop %v538
        %s541 = sld [smem:[#allocation6 + $0x280]]
        %v542 = vstv %s541
        %v543 = vmul.f32 %v423, %v542
        %v544 = vmul.f32 %v424, %v542
        %s545 = sld [smem:[#allocation7 + $0x5]]
        %v546 = vstv %s545
        %v547 = vadd.f32 %v543, %v546
        %v548 = vadd.f32 %v544, %v546
        %s549 = sld [smem:[#allocation6 + $0x281]]
        %v550 = vstv %s549
        %v551 = vmul.f32 %v426, %v550
        %v552 = vmul.f32 %v427, %v550
        %v553 = vadd.f32 %v547, %v551
        %v554 = vadd.f32 %v548, %v552
        %s555 = sld [smem:[#allocation6 + $0x282]]
        %v556 = vstv %s555
        %v557 = vmul.f32 %v429, %v556
        %v558 = vmul.f32 %v430, %v556
        %v559 = vadd.f32 %v553, %v557
        %v560 = vadd.f32 %v554, %v558
        %v561 = vtanh.pop %v559
        %v562 = vtanh.pop %v560
        %s563 = sld [smem:[#allocation6 + $0x300]]
        %v564 = vstv %s563
        %v565 = vmul.f32 %v423, %v564
        %v566 = vmul.f32 %v424, %v564
        %s567 = sld [smem:[#allocation7 + $0x6]]
        %v568 = vstv %s567
        %v569 = vadd.f32 %v565, %v568
        %v570 = vadd.f32 %v566, %v568
        %s571 = sld [smem:[#allocation6 + $0x301]]
        %v572 = vstv %s571
        %v573 = vmul.f32 %v426, %v572
        %v574 = vmul.f32 %v427, %v572
        %v575 = vadd.f32 %v569, %v573
        %v576 = vadd.f32 %v570, %v574
        %s577 = sld [smem:[#allocation6 + $0x302]]
        %v578 = vstv %s577
        %v579 = vmul.f32 %v429, %v578
        %v580 = vmul.f32 %v430, %v578
        %v581 = vadd.f32 %v575, %v579
        %v582 = vadd.f32 %v576, %v580
        %v583 = vtanh.pop %v581
        %v584 = vtanh.pop %v582
        %s585 = sld [smem:[#allocation6 + $0x380]]
        %v586 = vstv %s585
        %v587 = vmul.f32 %v423, %v586
        %v588 = vmul.f32 %v424, %v586
        %s589 = sld [smem:[#allocation7 + $0x7]]
        %v590 = vstv %s589
        %v591 = vadd.f32 %v587, %v590
        %v592 = vadd.f32 %v588, %v590
        %s593 = sld [smem:[#allocation6 + $0x381]]
        %v594 = vstv %s593
        %v595 = vmul.f32 %v426, %v594
        %v596 = vmul.f32 %v427, %v594
        %v597 = vadd.f32 %v591, %v595
        %v598 = vadd.f32 %v592, %v596
        %s599 = sld [smem:[#allocation6 + $0x382]]
        %v600 = vstv %s599
        %v601 = vmul.f32 %v429, %v600
        %v602 = vmul.f32 %v430, %v600
        %v603 = vadd.f32 %v597, %v601
        %v604 = vadd.f32 %v598, %v602
        %v605 = vtanh.pop %v603
        %v606 = vtanh.pop %v604
        %s607 = sld [smem:[#allocation6 + $0x400]]
        %v608 = vstv %s607
        %v609 = vmul.f32 %v423, %v608
        %v610 = vmul.f32 %v424, %v608
        %s611 = sld [smem:[#allocation7 + $0x8]]
        %v612 = vstv %s611
        %v613 = vadd.f32 %v609, %v612
        %v614 = vadd.f32 %v610, %v612
        %s615 = sld [smem:[#allocation6 + $0x401]]
        %v616 = vstv %s615
        %v617 = vmul.f32 %v426, %v616
        %v618 = vmul.f32 %v427, %v616
        %v619 = vadd.f32 %v613, %v617
        %v620 = vadd.f32 %v614, %v618
        %s621 = sld [smem:[#allocation6 + $0x402]]
        %v622 = vstv %s621
        %v623 = vmul.f32 %v429, %v622
        %v624 = vmul.f32 %v430, %v622
        %v625 = vadd.f32 %v619, %v623
        %v626 = vadd.f32 %v620, %v624
        %v627 = vtanh.pop %v625
        %v628 = vtanh.pop %v626
        %s629 = sld [smem:[#allocation6 + $0x480]]
        %v630 = vstv %s629
        %v631 = vmul.f32 %v423, %v630
        %v632 = vmul.f32 %v424, %v630
        %s633 = sld [smem:[#allocation7 + $0x9]]
        %v634 = vstv %s633
        %v635 = vadd.f32 %v631, %v634
        %v636 = vadd.f32 %v632, %v634
        %s637 = sld [smem:[#allocation6 + $0x481]]
        %v638 = vstv %s637
        %v639 = vmul.f32 %v426, %v638
        %v640 = vmul.f32 %v427, %v638
        %v641 = vadd.f32 %v635, %v639
        %v642 = vadd.f32 %v636, %v640
        %s643 = sld [smem:[#allocation6 + $0x482]]
        %v644 = vstv %s643
        %v645 = vmul.f32 %v429, %v644
        %v646 = vmul.f32 %v430, %v644
        %v647 = vadd.f32 %v641, %v645
        %v648 = vadd.f32 %v642, %v646
        %v649 = vtanh.pop %v647
        %v650 = vtanh.pop %v648
        %s651 = sld [smem:[#allocation9]]
        %v652 = vstv %s651
        %v653 = vmul.f32 %v451, %v652
        %v654 = vmul.f32 %v452, %v652
        %s655 = sld [smem:[#allocation10]]
        %v656 = vstv %s655
        %v657 = vadd.f32 %v653, %v656
        %v658 = vadd.f32 %v654, %v656
        %s659 = sld [smem:[#allocation9 + $0x1]]
        %v660 = vstv %s659
        %v661 = vmul.f32 %v473, %v660
        %v662 = vmul.f32 %v474, %v660
        %v663 = vadd.f32 %v657, %v661
        %v664 = vadd.f32 %v658, %v662
        %s665 = sld [smem:[#allocation9 + $0x2]]
        %v666 = vstv %s665
        %v667 = vmul.f32 %v495, %v666
        %v668 = vmul.f32 %v496, %v666
        %v669 = vadd.f32 %v663, %v667
        %v670 = vadd.f32 %v664, %v668
        %s671 = sld [smem:[#allocation9 + $0x3]]
        %v672 = vstv %s671
        %v673 = vmul.f32 %v517, %v672
        %v674 = vmul.f32 %v518, %v672
        %v675 = vadd.f32 %v669, %v673
        %v676 = vadd.f32 %v670, %v674
        %s677 = sld [smem:[#allocation9 + $0x4]]
        %v678 = vstv %s677
        %v679 = vmul.f32 %v539, %v678
        %v680 = vmul.f32 %v540, %v678
        %v681 = vadd.f32 %v675, %v679
        %v682 = vadd.f32 %v676, %v680
        %s683 = sld [smem:[#allocation9 + $0x5]]
        %v684 = vstv %s683
        %v685 = vmul.f32 %v561, %v684
        %v686 = vmul.f32 %v562, %v684
        %v687 = vadd.f32 %v681, %v685
        %v688 = vadd.f32 %v682, %v686
        %s689 = sld [smem:[#allocation9 + $0x6]]
        %v690 = vstv %s689
        %v691 = vmul.f32 %v583, %v690
        %v692 = vmul.f32 %v584, %v690
        %v693 = vadd.f32 %v687, %v691
        %v694 = vadd.f32 %v688, %v692
        %s695 = sld [smem:[#allocation9 + $0x7]]
        %v696 = vstv %s695
        %v697 = vmul.f32 %v605, %v696
        %v698 = vmul.f32 %v606, %v696
        %v699 = vadd.f32 %v693, %v697
        %v700 = vadd.f32 %v694, %v698
        %s701 = sld [smem:[#allocation9 + $0x8]]
        %v702 = vstv %s701
        %v703 = vmul.f32 %v627, %v702
        %v704 = vmul.f32 %v628, %v702
        %v705 = vadd.f32 %v699, %v703
        %v706 = vadd.f32 %v700, %v704
        %s707 = sld [smem:[#allocation9 + $0x9]]
        %v708 = vstv %s707
        %v709 = vmul.f32 %v649, %v708
        %v710 = vmul.f32 %v650, %v708
        %v711 = vadd.f32 %v705, %v709
        %v712 = vadd.f32 %v706, %v710
        %v713 = vtanh.pop %v711
        %v714 = vtanh.pop %v712
        %s715 = sld [smem:[#allocation9 + $0x80]]
        %v716 = vstv %s715
        %v717 = vmul.f32 %v451, %v716
        %v718 = vmul.f32 %v452, %v716
        %s719 = sld [smem:[#allocation10 + $0x1]]
        %v720 = vstv %s719
        %v721 = vadd.f32 %v717, %v720
        %v722 = vadd.f32 %v718, %v720
        %s723 = sld [smem:[#allocation9 + $0x81]]
        %v724 = vstv %s723
        %v725 = vmul.f32 %v473, %v724
        %v726 = vmul.f32 %v474, %v724
        %v727 = vadd.f32 %v721, %v725
        %v728 = vadd.f32 %v722, %v726
        %s729 = sld [smem:[#allocation9 + $0x82]]
        %v730 = vstv %s729
        %v731 = vmul.f32 %v495, %v730
        %v732 = vmul.f32 %v496, %v730
        %v733 = vadd.f32 %v727, %v731
        %v734 = vadd.f32 %v728, %v732
        %s735 = sld [smem:[#allocation9 + $0x83]]
        %v736 = vstv %s735
        %v737 = vmul.f32 %v517, %v736
        %v738 = vmul.f32 %v518, %v736
        %v739 = vadd.f32 %v733, %v737
        %v740 = vadd.f32 %v734, %v738
        %s741 = sld [smem:[#allocation9 + $0x84]]
        %v742 = vstv %s741
        %v743 = vmul.f32 %v539, %v742
        %v744 = vmul.f32 %v540, %v742
        %v745 = vadd.f32 %v739, %v743
        %v746 = vadd.f32 %v740, %v744
        %s747 = sld [smem:[#allocation9 + $0x85]]
        %v748 = vstv %s747
        %v749 = vmul.f32 %v561, %v748
        %v750 = vmul.f32 %v562, %v748
        %v751 = vadd.f32 %v745, %v749
        %v752 = vadd.f32 %v746, %v750
        %s753 = sld [smem:[#allocation9 + $0x86]]
        %v754 = vstv %s753
        %v755 = vmul.f32 %v583, %v754
        %v756 = vmul.f32 %v584, %v754
        %v757 = vadd.f32 %v751, %v755
        %v758 = vadd.f32 %v752, %v756
        %s759 = sld [smem:[#allocation9 + $0x87]]
        %v760 = vstv %s759
        %v761 = vmul.f32 %v605, %v760
        %v762 = vmul.f32 %v606, %v760
        %v763 = vadd.f32 %v757, %v761
        %v764 = vadd.f32 %v758, %v762
        %s765 = sld [smem:[#allocation9 + $0x88]]
        %v766 = vstv %s765
        %v767 = vmul.f32 %v627, %v766
        %v768 = vmul.f32 %v628, %v766
        %v769 = vadd.f32 %v763, %v767
        %v770 = vadd.f32 %v764, %v768
        %s771 = sld [smem:[#allocation9 + $0x89]]
        %v772 = vstv %s771
        %v773 = vmul.f32 %v649, %v772
        %v774 = vmul.f32 %v650, %v772
        %v775 = vadd.f32 %v769, %v773
        %v776 = vadd.f32 %v770, %v774
        %v777 = vtanh.pop %v775
        %v778 = vtanh.pop %v776
        %s779 = sld [smem:[#allocation9 + $0x100]]
        %v780 = vstv %s779
        %v781 = vmul.f32 %v451, %v780
        %v782 = vmul.f32 %v452, %v780
        %s783 = sld [smem:[#allocation10 + $0x2]]
        %v784 = vstv %s783
        %v785 = vadd.f32 %v781, %v784
        %v786 = vadd.f32 %v782, %v784
        %s787 = sld [smem:[#allocation9 + $0x101]]
        %v788 = vstv %s787
        %v789 = vmul.f32 %v473, %v788
        %v790 = vmul.f32 %v474, %v788
        %v791 = vadd.f32 %v785, %v789
        %v792 = vadd.f32 %v786, %v790
        %s793 = sld [smem:[#allocation9 + $0x102]]
        %v794 = vstv %s793
        %v795 = vmul.f32 %v495, %v794
        %v796 = vmul.f32 %v496, %v794
        %v797 = vadd.f32 %v791, %v795
        %v798 = vadd.f32 %v792, %v796
        %s799 = sld [smem:[#allocation9 + $0x103]]
        %v800 = vstv %s799
        %v801 = vmul.f32 %v517, %v800
        %v802 = vmul.f32 %v518, %v800
        %v803 = vadd.f32 %v797, %v801
        %v804 = vadd.f32 %v798, %v802
        %s805 = sld [smem:[#allocation9 + $0x104]]
        %v806 = vstv %s805
        %v807 = vmul.f32 %v539, %v806
        %v808 = vmul.f32 %v540, %v806
        %v809 = vadd.f32 %v803, %v807
        %v810 = vadd.f32 %v804, %v808
        %s811 = sld [smem:[#allocation9 + $0x105]]
        %v812 = vstv %s811
        %v813 = vmul.f32 %v561, %v812
        %v814 = vmul.f32 %v562, %v812
        %v815 = vadd.f32 %v809, %v813
        %v816 = vadd.f32 %v810, %v814
        %s817 = sld [smem:[#allocation9 + $0x106]]
        %v818 = vstv %s817
        %v819 = vmul.f32 %v583, %v818
        %v820 = vmul.f32 %v584, %v818
        %v821 = vadd.f32 %v815, %v819
        %v822 = vadd.f32 %v816, %v820
        %s823 = sld [smem:[#allocation9 + $0x107]]
        %v824 = vstv %s823
        %v825 = vmul.f32 %v605, %v824
        %v826 = vmul.f32 %v606, %v824
        %v827 = vadd.f32 %v821, %v825
        %v828 = vadd.f32 %v822, %v826
        %s829 = sld [smem:[#allocation9 + $0x108]]
        %v830 = vstv %s829
        %v831 = vmul.f32 %v627, %v830
        %v832 = vmul.f32 %v628, %v830
        %v833 = vadd.f32 %v827, %v831
        %v834 = vadd.f32 %v828, %v832
        %s835 = sld [smem:[#allocation9 + $0x109]]
        %v836 = vstv %s835
        %v837 = vmul.f32 %v649, %v836
        %v838 = vmul.f32 %v650, %v836
        %v839 = vadd.f32 %v833, %v837
        %v840 = vadd.f32 %v834, %v838
        %v841 = vtanh.pop %v839
        %v842 = vtanh.pop %v840
        %s843 = sld [smem:[#allocation9 + $0x180]]
        %v844 = vstv %s843
        %v845 = vmul.f32 %v451, %v844
        %v846 = vmul.f32 %v452, %v844
        %s847 = sld [smem:[#allocation10 + $0x3]]
        %v848 = vstv %s847
        %v849 = vadd.f32 %v845, %v848
        %v850 = vadd.f32 %v846, %v848
        %s851 = sld [smem:[#allocation9 + $0x181]]
        %v852 = vstv %s851
        %v853 = vmul.f32 %v473, %v852
        %v854 = vmul.f32 %v474, %v852
        %v855 = vadd.f32 %v849, %v853
        %v856 = vadd.f32 %v850, %v854
        %s857 = sld [smem:[#allocation9 + $0x182]]
        %v858 = vstv %s857
        %v859 = vmul.f32 %v495, %v858
        %v860 = vmul.f32 %v496, %v858
        %v861 = vadd.f32 %v855, %v859
        %v862 = vadd.f32 %v856, %v860
        %s863 = sld [smem:[#allocation9 + $0x183]]
        %v864 = vstv %s863
        %v865 = vmul.f32 %v517, %v864
        %v866 = vmul.f32 %v518, %v864
        %v867 = vadd.f32 %v861, %v865
        %v868 = vadd.f32 %v862, %v866
        %s869 = sld [smem:[#allocation9 + $0x184]]
        %v870 = vstv %s869
        %v871 = vmul.f32 %v539, %v870
        %v872 = vmul.f32 %v540, %v870
        %v873 = vadd.f32 %v867, %v871
        %v874 = vadd.f32 %v868, %v872
        %s875 = sld [smem:[#allocation9 + $0x185]]
        %v876 = vstv %s875
        %v877 = vmul.f32 %v561, %v876
        %v878 = vmul.f32 %v562, %v876
        %v879 = vadd.f32 %v873, %v877
        %v880 = vadd.f32 %v874, %v878
        %s881 = sld [smem:[#allocation9 + $0x186]]
        %v882 = vstv %s881
        %v883 = vmul.f32 %v583, %v882
        %v884 = vmul.f32 %v584, %v882
        %v885 = vadd.f32 %v879, %v883
        %v886 = vadd.f32 %v880, %v884
        %s887 = sld [smem:[#allocation9 + $0x187]]
        %v888 = vstv %s887
        %v889 = vmul.f32 %v605, %v888
        %v890 = vmul.f32 %v606, %v888
        %v891 = vadd.f32 %v885, %v889
        %v892 = vadd.f32 %v886, %v890
        %s893 = sld [smem:[#allocation9 + $0x188]]
        %v894 = vstv %s893
        %v895 = vmul.f32 %v627, %v894
        %v896 = vmul.f32 %v628, %v894
        %v897 = vadd.f32 %v891, %v895
        %v898 = vadd.f32 %v892, %v896
        %s899 = sld [smem:[#allocation9 + $0x189]]
        %v900 = vstv %s899
        %v901 = vmul.f32 %v649, %v900
        %v902 = vmul.f32 %v650, %v900
        %v903 = vadd.f32 %v897, %v901
        %v904 = vadd.f32 %v898, %v902
        %v905 = vtanh.pop %v903
        %v906 = vtanh.pop %v904
        %s907 = sld [smem:[#allocation9 + $0x200]]
        %v908 = vstv %s907
        %v909 = vmul.f32 %v451, %v908
        %v910 = vmul.f32 %v452, %v908
        %s911 = sld [smem:[#allocation10 + $0x4]]
        %v912 = vstv %s911
        %v913 = vadd.f32 %v909, %v912
        %v914 = vadd.f32 %v910, %v912
        %s915 = sld [smem:[#allocation9 + $0x201]]
        %v916 = vstv %s915
        %v917 = vmul.f32 %v473, %v916
        %v918 = vmul.f32 %v474, %v916
        %v919 = vadd.f32 %v913, %v917
        %v920 = vadd.f32 %v914, %v918
        %s921 = sld [smem:[#allocation9 + $0x202]]
        %v922 = vstv %s921
        %v923 = vmul.f32 %v495, %v922
        %v924 = vmul.f32 %v496, %v922
        %v925 = vadd.f32 %v919, %v923
        %v926 = vadd.f32 %v920, %v924
        %s927 = sld [smem:[#allocation9 + $0x203]]
        %v928 = vstv %s927
        %v929 = vmul.f32 %v517, %v928
        %v930 = vmul.f32 %v518, %v928
        %v931 = vadd.f32 %v925, %v929
        %v932 = vadd.f32 %v926, %v930
        %s933 = sld [smem:[#allocation9 + $0x204]]
        %v934 = vstv %s933
        %v935 = vmul.f32 %v539, %v934
        %v936 = vmul.f32 %v540, %v934
        %v937 = vadd.f32 %v931, %v935
        %v938 = vadd.f32 %v932, %v936
        %s939 = sld [smem:[#allocation9 + $0x205]]
        %v940 = vstv %s939
        %v941 = vmul.f32 %v561, %v940
        %v942 = vmul.f32 %v562, %v940
        %v943 = vadd.f32 %v937, %v941
        %v944 = vadd.f32 %v938, %v942
        %s945 = sld [smem:[#allocation9 + $0x206]]
        %v946 = vstv %s945
        %v947 = vmul.f32 %v583, %v946
        %v948 = vmul.f32 %v584, %v946
        %v949 = vadd.f32 %v943, %v947
        %v950 = vadd.f32 %v944, %v948
        %s951 = sld [smem:[#allocation9 + $0x207]]
        %v952 = vstv %s951
        %v953 = vmul.f32 %v605, %v952
        %v954 = vmul.f32 %v606, %v952
        %v955 = vadd.f32 %v949, %v953
        %v956 = vadd.f32 %v950, %v954
        %s957 = sld [smem:[#allocation9 + $0x208]]
        %v958 = vstv %s957
        %v959 = vmul.f32 %v627, %v958
        %v960 = vmul.f32 %v628, %v958
        %v961 = vadd.f32 %v955, %v959
        %v962 = vadd.f32 %v956, %v960
        %s963 = sld [smem:[#allocation9 + $0x209]]
        %v964 = vstv %s963
        %v965 = vmul.f32 %v649, %v964
        %v966 = vmul.f32 %v650, %v964
        %v967 = vadd.f32 %v961, %v965
        %v968 = vadd.f32 %v962, %v966
        %v969 = vtanh.pop %v967
        %v970 = vtanh.pop %v968
        %s971 = sld [smem:[#allocation12]]
        %v972 = vstv %s971
        %v973 = vmul.f32 %v713, %v972
        %v974 = vmul.f32 %v714, %v972
        %s975 = sld [smem:[#allocation13]]
        %v976 = vstv %s975
        %v977 = vadd.f32 %v973, %v976
        %v978 = vadd.f32 %v974, %v976
        %s979 = sld [smem:[#allocation12 + $0x1]]
        %v980 = vstv %s979
        %v981 = vmul.f32 %v777, %v980
        %v982 = vmul.f32 %v778, %v980
        %v983 = vadd.f32 %v977, %v981
        %v984 = vadd.f32 %v978, %v982
        %s985 = sld [smem:[#allocation12 + $0x2]]
        %v986 = vstv %s985
        %v987 = vmul.f32 %v841, %v986
        %v988 = vmul.f32 %v842, %v986
        %v989 = vadd.f32 %v983, %v987
        %v990 = vadd.f32 %v984, %v988
        %s991 = sld [smem:[#allocation12 + $0x3]]
        %v992 = vstv %s991
        %v993 = vmul.f32 %v905, %v992
        %v994 = vmul.f32 %v906, %v992
        %v995 = vadd.f32 %v989, %v993
        %v996 = vadd.f32 %v990, %v994
        %s997 = sld [smem:[#allocation12 + $0x4]]
        %v998 = vstv %s997
        %v999 = vmul.f32 %v969, %v998
        %v1000 = vmul.f32 %v970, %v998
        %v1001 = vadd.f32 %v995, %v999
        %v1002 = vadd.f32 %v996, %v1000
        %v1003 = vtanh.pop %v1001
        %v1004 = vtanh.pop %v1002
        %s1005 = sld [smem:[#allocation12 + $0x80]]
        %v1006 = vstv %s1005
        %v1007 = vmul.f32 %v713, %v1006
        %v1008 = vmul.f32 %v714, %v1006
        %s1009 = sld [smem:[#allocation13 + $0x1]]
        %v1010 = vstv %s1009
        %v1011 = vadd.f32 %v1007, %v1010
        %v1012 = vadd.f32 %v1008, %v1010
        %s1013 = sld [smem:[#allocation12 + $0x81]]
        %v1014 = vstv %s1013
        %v1015 = vmul.f32 %v777, %v1014
        %v1016 = vmul.f32 %v778, %v1014
        %v1017 = vadd.f32 %v1011, %v1015
        %v1018 = vadd.f32 %v1012, %v1016
        %s1019 = sld [smem:[#allocation12 + $0x82]]
        %v1020 = vstv %s1019
        %v1021 = vmul.f32 %v841, %v1020
        %v1022 = vmul.f32 %v842, %v1020
        %v1023 = vadd.f32 %v1017, %v1021
        %v1024 = vadd.f32 %v1018, %v1022
        %s1025 = sld [smem:[#allocation12 + $0x83]]
        %v1026 = vstv %s1025
        %v1027 = vmul.f32 %v905, %v1026
        %v1028 = vmul.f32 %v906, %v1026
        %v1029 = vadd.f32 %v1023, %v1027
        %v1030 = vadd.f32 %v1024, %v1028
        %s1031 = sld [smem:[#allocation12 + $0x84]]
        %v1032 = vstv %s1031
        %v1033 = vmul.f32 %v969, %v1032
        %v1034 = vmul.f32 %v970, %v1032
        %v1035 = vadd.f32 %v1029, %v1033
        %v1036 = vadd.f32 %v1030, %v1034
        %v1037 = vtanh.pop %v1035
        %v1038 = vtanh.pop %v1036
        %1039 = vst [vmem:[%s420] sm:$0xff] %v1003
        %1040 = vst [vmem:[%s420 + $0x8] sm:$0xff] %v1004
        %s1041 = scalar_lea.vmem %s420, 16 [#allocation15]
        %1042 = vst [vmem:[%s1041] sm:$0xff] %v1037
        %1043 = vst [vmem:[%s1041 + $0x8] sm:$0xff] %v1038
        %s1044 = sand.u32 %s204, 1
        %s1045 = scalar_lea.sflag [#allocation4], %s1044
        %s1046 = sand.u32 %s204, 1
        %s1047 = smul.addr %s1046, 32
        %s1048 = scalar_lea.vmem [#allocation15], %s1047
        // Predicated region
        $region77: #{tpu_custom_call.1} parent=47 // pred_check
          %p1049 = pneg %p214
        $region78: #{tpu_custom_call.1} parent=47 // pred_check_branch
          %1051 = sbr.rel (%p1049) target = $region80
        $region79: #{tpu_custom_call.1} parent=47 // pred_region
          #allocation19 [shape = 'u32[6]{0}', space=smem, size = 0x18, scoped, tag = 'DMA stride descriptor']
          %s1052 = smul.u32 2, %s33
          %1054 = vsyncadd %s1045, 0
          %s1055 = smul.addr %s32, 8
          %s1056 = sadd.s32 %s1052, %s1055
          %s1057 = smul.addr %s1056, 8
          %s1058 = scalar_lea.hbm %s7, %s1057
          %s1060 = sshll.u32 1, 14
          %s1061 = sxor.u32 4294967295, %s1060
          %s1064 = sshll.u32 7, 18
          %s1065 = sxor.u32 4294967295, %s1064
          %s1066 = sand.u32 0, %s1065
          %s1068 = sor.u32 %s1066, 0
          %s1069 = sshll.u32 %s1048, 4
          %s1070 = int_to_ptr.vmem [resolvable:$true] %s1069
          %s1071 = sshll.u32 %s1058, 4
          %s1072 = int_to_ptr.hbm [resolvable:$true] %s1071
          %1078 = sst [smem:[#allocation19]] 256
          %s1079 = scalar_lea.smem [#allocation19], 1
          %1080 = sst [smem:[%s1079]] 512
          %s1081 = scalar_lea.smem [#allocation19], 2
          %1082 = sst [smem:[%s1081]] 2
          %s1083 = scalar_lea.smem [#allocation19], 3
          %1084 = sst [smem:[%s1083]] 128
          %s1085 = scalar_lea.smem [#allocation19], 4
          %1086 = sst [smem:[%s1085]] 128
          %s1087 = scalar_lea.smem [#allocation19], 5
          %1088 = sst [smem:[%s1087]] 8
          %1090 = dma.general %s1070, 512, %s1072, %s1045, [#allocation18], [#allocation19], %s1068, 0
        $region80: #{tpu_custom_call.1} parent=47 // pred_fallthru
          _
      $region48: #{tpu_custom_call.1} parent=5 // pred_fallthru
        _
      %p1091 = scmp.le.s32.totalorder 2, %s23
      // Predicated region
      $region81: #{tpu_custom_call.1} parent=5 // pred_check
        %p1092 = pneg %p1091
      $region82: #{tpu_custom_call.1} parent=5 // pred_check_branch
        %1094 = sbr.rel (%p1092) target = $region84
      $region83: #{tpu_custom_call.1} parent=5 // pred_region
        %s1095 = ssub.s32 %s23, 2
        // Predicated region
        $region85: #{tpu_custom_call.1} parent=83 // pred_check
          %p1096 = pneg %p220
        $region86: #{tpu_custom_call.1} parent=83 // pred_check_branch
          %1098 = sbr.rel (%p1096) target = $region88
        $region87: #{tpu_custom_call.1} parent=83 // pred_region
          %s1099 = sand.u32 %s205, 1
          %s1100 = scalar_lea.sflag [#allocation4], %s1099
          %s1101 = sand.u32 %s205, 1
          %s1102 = smul.addr %s1101, 32
          %s1103 = scalar_lea.vmem [#allocation15], %s1102
          %1105 = dma.done %s1100, 512
        $region88: #{tpu_custom_call.1} parent=83 // pred_fallthru
          _
      $region84: #{tpu_custom_call.1} parent=5 // pred_fallthru
        _
    $region6: #{tpu_custom_call.1} parent=1 // loop_footer
      %s27 = sadd.s32 1, %s23
    $region7: #{tpu_custom_call.1} parent=1 // loop_footer_branch
      %22 = sbr.rel target = $region3
    $region8: #{tpu_custom_call.1} parent=1 // loop_exit
      _
    %1106 = vsyncpa [#allocation3], 1
    %s1107 = scalar_lea.sflag [#allocation3], 1
    %1108 = vsyncpa %s1107, 1
    %1109 = vsyncpa [#allocation4], 1
    %s1110 = scalar_lea.sflag [#allocation4], 1
    %1111 = vsyncpa %s1110, 1
    %1112 = vsyncpa [#allocation5], 1
    %s1113 = scalar_lea.sflag [#allocation5], 1
    %1114 = vsyncpa %s1113, 1
    %1115 = vsyncpa [#allocation8], 1
    %1116 = vsyncpa [#allocation11], 1
    %1117 = vsyncpa [#allocation14], 1

</llo_original>
